<compile_context>
chip_gen: v7x
topology: tpu7x:2x2x1
jax: 0.10.0
libtpu: 0.0.40
codegen_flags: <defaults>
</compile_context>

<pallas_src>
import jax
import jax.numpy as jnp
from jax.experimental import pallas as pl
from jax.experimental.pallas import tpu as pltpu

NUM_FEATURES = 512
NUM_LABELVEC = 300
IN_DIM = NUM_FEATURES + 2 * NUM_LABELVEC + 8   # 1120
NUM_LATENT = 512
NUM_RELATIONS = 71
OUT_PAD = 128                                  # lane-dense padded output width
TILE_B = 512                                   # batch tile (multiple of 256 for MXU)


def _round_up(n, m):
    return ((n + m - 1) // m) * m


def _mlp_kernel(x_ref, w1_ref, b1_ref, w2_ref, b2_ref, o_ref):
    # Fused MLP hot path, all operands resident in VMEM:
    #   matmul -> bias -> ReLU -> matmul -> bias
    x = x_ref[...]
    h = jnp.dot(x, w1_ref[...], preferred_element_type=jnp.float32) + b1_ref[...]
    h = jnp.maximum(h, 0.0)
    out = jnp.dot(h, w2_ref[...], preferred_element_type=jnp.float32) + b2_ref[...]
    o_ref[...] = out.astype(o_ref.dtype)


@jax.jit
def relation_pred_forward(x, w1, b1, w2, b2):
    """Pallas forward pass.

    x : [B, 1120] float32
    w1: [1120, 512], b1: [1, 512]
    w2: [512, 71],   b2: [1, 71]
    returns [B, 71] float32
    """
    B = x.shape[0]

    # Batch tiling: TILE_B for large batches, shrink (multiple of 8) for tiny ones.
    tile_b = min(TILE_B, _round_up(B, 8))
    Bp = _round_up(B, tile_b)
    x_p = jnp.pad(x, ((0, Bp - B), (0, 0))) if Bp != B else x

    # Pad second layer to 128 output lanes: unmasked stores + full MXU result tile.
    w2_p = jnp.pad(w2, ((0, 0), (0, OUT_PAD - NUM_RELATIONS)))
    b2_p = jnp.pad(b2, ((0, 0), (0, OUT_PAD - NUM_RELATIONS)))

    grid = (Bp // tile_b,)

    flops = 2 * Bp * (IN_DIM * NUM_LATENT + NUM_LATENT * OUT_PAD)
    bytes_accessed = 4 * (
        Bp * IN_DIM                         # x
        + IN_DIM * NUM_LATENT + NUM_LATENT  # w1, b1
        + NUM_LATENT * OUT_PAD + OUT_PAD    # w2, b2 (padded)
        + Bp * OUT_PAD                      # out
    )

    out_p = pl.pallas_call(
        _mlp_kernel,
        out_shape=jax.ShapeDtypeStruct((Bp, OUT_PAD), jnp.float32),
        grid=grid,
        in_specs=[
            # Activations: tiled along batch (double-buffered DMA overlaps compute).
            pl.BlockSpec((tile_b, IN_DIM), lambda i: (i, 0)),
            # Weights/biases: constant block index -> fetched once, VMEM-resident.
            pl.BlockSpec((IN_DIM, NUM_LATENT), lambda i: (0, 0)),
            pl.BlockSpec((1, NUM_LATENT), lambda i: (0, 0)),
            pl.BlockSpec((NUM_LATENT, OUT_PAD), lambda i: (0, 0)),
            pl.BlockSpec((1, OUT_PAD), lambda i: (0, 0)),
        ],
        out_specs=pl.BlockSpec((tile_b, OUT_PAD), lambda i: (i, 0)),
        compiler_params=pltpu.CompilerParams(
            dimension_semantics=("parallel",),       # shards batch tiles across TCs on v7x
            vmem_limit_bytes=32 * 1024 * 1024,       # lifts v5e's 16 MiB default cap
        ),
        cost_estimate=pl.CostEstimate(
            flops=flops, transcendentals=0, bytes_accessed=bytes_accessed),
    )(x_p, w1, b1, w2_p, b2_p)

    # Strip batch padding and the 71->128 lane padding outside the kernel.
    return out_p[:B, :NUM_RELATIONS]


def init_params(key):
    """Deterministic init mimicking torch.nn.Linear (uniform +-1/sqrt(fan_in))."""
    k1, k2, k3, k4 = jax.random.split(key, 4)
    bound1 = 1.0 / jnp.sqrt(IN_DIM)
    bound2 = 1.0 / jnp.sqrt(NUM_LATENT)
    w1 = jax.random.uniform(k1, (IN_DIM, NUM_LATENT), jnp.float32, -bound1, bound1)
    b1 = jax.random.uniform(k2, (1, NUM_LATENT), jnp.float32, -bound1, bound1)
    w2 = jax.random.uniform(k3, (NUM_LATENT, NUM_RELATIONS), jnp.float32, -bound2, bound2)
    b2 = jax.random.uniform(k4, (1, NUM_RELATIONS), jnp.float32, -bound2, bound2)
    return w1, b1, w2, b2


def reference_forward(x, w1, b1, w2, b2):
    h = jnp.maximum(x @ w1 + b1, 0.0)
    return h @ w2 + b2


if __name__ == "__main__":
    key = jax.random.PRNGKey(0)
    kx, kp = jax.random.split(key)

    batch = 8
    x = jax.random.normal(kx, (batch, IN_DIM), jnp.float32)
    w1, b1, w2, b2 = init_params(kp)

    out = relation_pred_forward(x, w1, b1, w2, b2)
    out = jax.block_until_ready(out)

    ref = reference_forward(x, w1, b1, w2, b2)
    assert out.shape == (batch, NUM_RELATIONS)
    assert jnp.allclose(out, ref, atol=1e-4, rtol=1e-4), "mismatch vs JAX reference"

    print("KERNEL_OK")
</pallas_src>

<mosaic_0001>
module attributes {stable_mosaic.version = 11 : i64} {
  func.func @_mlp_kernel(%arg0: i32, %arg1: memref<8x1120xf32, #tpu.memory_space<vmem>>, %arg2: memref<1120x512xf32, #tpu.memory_space<vmem>>, %arg3: memref<1x512xf32, #tpu.memory_space<vmem>>, %arg4: memref<512x128xf32, #tpu.memory_space<vmem>>, %arg5: memref<1x128xf32, #tpu.memory_space<vmem>>, %arg6: memref<8x128xf32, #tpu.memory_space<vmem>>) attributes {dimension_semantics = [#tpu.dimension_semantics<parallel>], iteration_bounds = array<i64: 1>, scalar_prefetch = 0 : i64, scratch_operands = 0 : i64, tpu.core_type = #tpu.core_type<tc>, window_params = [{transform_indices = @transform_0, window_bounds = array<i64: 8, 1120>}, {pipeline_mode = #tpu.pipeline_mode<synchronous>, transform_indices = @transform_1, window_bounds = array<i64: 1120, 512>}, {pipeline_mode = #tpu.pipeline_mode<synchronous>, transform_indices = @transform_2, window_bounds = array<i64: 1, 512>}, {pipeline_mode = #tpu.pipeline_mode<synchronous>, transform_indices = @transform_3, window_bounds = array<i64: 512, 128>}, {pipeline_mode = #tpu.pipeline_mode<synchronous>, transform_indices = @transform_4, window_bounds = array<i64: 1, 128>}, {transform_indices = @transform_5, window_bounds = array<i64: 8, 128>}]} {
    %c0 = arith.constant 0 : index
    %c0_0 = arith.constant 0 : index
    %0 = vector.load %arg1[%c0, %c0_0] : memref<8x1120xf32, #tpu.memory_space<vmem>>, vector<8x1120xf32>
    %c0_1 = arith.constant 0 : index
    %c0_2 = arith.constant 0 : index
    %1 = vector.load %arg2[%c0_1, %c0_2] : memref<1120x512xf32, #tpu.memory_space<vmem>>, vector<1120x512xf32>
    %cst = arith.constant dense<0.000000e+00> : vector<8x512xf32>
    %2 = tpu.matmul %0, %1, %cst {dimension_numbers = #tpu.dot_dimension_numbers<[1], [0], [0], [1], [0, 0, 1, 1], [], []>} : vector<8x1120xf32>, vector<1120x512xf32>, vector<8x512xf32> -> vector<8x512xf32>
    %c0_3 = arith.constant 0 : index
    %c0_4 = arith.constant 0 : index
    %3 = vector.load %arg3[%c0_3, %c0_4] : memref<1x512xf32, #tpu.memory_space<vmem>>, vector<1x512xf32>
    %4 = vector.broadcast %3 : vector<1x512xf32> to vector<8x512xf32>
    %5 = arith.addf %2, %4 : vector<8x512xf32>
    %cst_5 = arith.constant 0.000000e+00 : f32
    %6 = vector.broadcast %cst_5 : f32 to vector<8x512xf32>
    %7 = arith.maximumf %5, %6 : vector<8x512xf32>
    %c0_6 = arith.constant 0 : index
    %c0_7 = arith.constant 0 : index
    %8 = vector.load %arg4[%c0_6, %c0_7] : memref<512x128xf32, #tpu.memory_space<vmem>>, vector<512x128xf32>
    %cst_8 = arith.constant dense<0.000000e+00> : vector<8x128xf32>
    %9 = tpu.matmul %7, %8, %cst_8 {dimension_numbers = #tpu.dot_dimension_numbers<[1], [0], [0], [1], [0, 0, 1, 1], [], []>} : vector<8x512xf32>, vector<512x128xf32>, vector<8x128xf32> -> vector<8x128xf32>
    %c0_9 = arith.constant 0 : index
    %c0_10 = arith.constant 0 : index
    %10 = vector.load %arg5[%c0_9, %c0_10] : memref<1x128xf32, #tpu.memory_space<vmem>>, vector<1x128xf32>
    %11 = vector.broadcast %10 : vector<1x128xf32> to vector<8x128xf32>
    %12 = arith.addf %9, %11 : vector<8x128xf32>
    %c0_11 = arith.constant 0 : index
    %c0_12 = arith.constant 0 : index
    %13 = vector.load %arg6[%c0_11, %c0_12] : memref<8x128xf32, #tpu.memory_space<vmem>>, vector<8x128xf32>
    tpu.vector_store %arg6[%c0_11, %c0_12], %12 {strides = array<i32>} : memref<8x128xf32, #tpu.memory_space<vmem>>, vector<8x128xf32>,
    return
  }
  func.func @transform_0(%arg0: i32) -> (i32, i32) {
    %c0_i32 = arith.constant 0 : i32
    %c0_i32_0 = arith.constant 0 : i32
    return %arg0, %c0_i32 : i32, i32
  }
  func.func @transform_1(%arg0: i32) -> (i32, i32) {
    %c0_i32 = arith.constant 0 : i32
    %c0_i32_0 = arith.constant 0 : i32
    %c0_i32_1 = arith.constant 0 : i32
    return %c0_i32, %c0_i32_0 : i32, i32
  }
  func.func @transform_2(%arg0: i32) -> (i32, i32) {
    %c0_i32 = arith.constant 0 : i32
    %c0_i32_0 = arith.constant 0 : i32
    %c0_i32_1 = arith.constant 0 : i32
    return %c0_i32, %c0_i32_0 : i32, i32
  }
  func.func @transform_3(%arg0: i32) -> (i32, i32) {
    %c0_i32 = arith.constant 0 : i32
    %c0_i32_0 = arith.constant 0 : i32
    %c0_i32_1 = arith.constant 0 : i32
    return %c0_i32, %c0_i32_0 : i32, i32
  }
  func.func @transform_4(%arg0: i32) -> (i32, i32) {
    %c0_i32 = arith.constant 0 : i32
    %c0_i32_0 = arith.constant 0 : i32
    %c0_i32_1 = arith.constant 0 : i32
    return %c0_i32, %c0_i32_0 : i32, i32
  }
  func.func @transform_5(%arg0: i32) -> (i32, i32) {
    %c0_i32 = arith.constant 0 : i32
    %c0_i32_0 = arith.constant 0 : i32
    return %arg0, %c0_i32 : i32, i32
  }
}

</mosaic_0001>

<llo_original>
// kernel: relation_pred_forward.1
$region0: #{relation_pred_forward.1}
  #allocation0 [shape = 'u32[]', space=smem, size = 0x4, offset = 0x4, fixed_abs, tag = 'smem constant byte address 0x4 - core index']
  #allocation1 [shape = 'u32[144,128]{1,0:T(1,128)}', space=vmem, size = 0x12000, scoped, tag = 'internal scratch']
  %s0 = inlined_call_operand.hbm [shape: f32[8,1120], index: 0, kind: input, shape index: {}]
  %s1 = inlined_call_operand.hbm [shape: f32[1120,512], index: 1, kind: input, shape index: {}]
  %s2 = inlined_call_operand.hbm [shape: f32[1,512], index: 2, kind: input, shape index: {}]
  %s3 = inlined_call_operand.vmem [shape: f32[512,128], index: 3, kind: input, shape index: {}]
  %s4 = inlined_call_operand.vmem [shape: f32[1,128], index: 4, kind: input, shape index: {}]
  %s5 = inlined_call_operand.hbm [shape: f32[8,128], index: 5, kind: output, shape index: {}]
  %s6 = sld [smem:[#allocation0]]
  $region42: #{relation_pred_forward.1} parent=0
    _
  %s8 = ssub.s32 1, %s6
  %s9 = scalar_select 0, %s8, %s6
  $region1: #{relation_pred_forward.1} parent=0
    #allocation2 [shape = 'u8[36864]{0}', space=vmem, size = 0x9000, scoped, tag = 'input window, operand 0, single buffered']
    #allocation3 [shape = 's32[1]{0}', space=sflag, size = 0x4, scoped, tag = 'scoped memory for relation_pred_forward.1']
    #allocation4 [shape = 's32[1]{0}', space=sflag, size = 0x4, scoped, tag = 'scoped memory for relation_pred_forward.1']
    #allocation5 [shape = 'u8[2293760]{0}', space=vmem, size = 0x230000, scoped, tag = 'input window, operand 1, single buffered']
    #allocation6 [shape = 's32[1]{0}', space=sflag, size = 0x4, scoped, tag = 'scoped memory for relation_pred_forward.1']
    #allocation7 [shape = 'u8[2048]{0}', space=vmem, size = 0x800, scoped, tag = 'input window, operand 2, single buffered']
    #allocation8 [shape = 'u8[4096]{0}', space=vmem, size = 0x1000, scoped, tag = 'output window, operand 0, single buffered']
    %10 = vsyncpa [#allocation3], 0
    %11 = vsyncpa [#allocation6], 0
    %12 = vsyncpa [#allocation4], 0
    // Predicated region
    $region2: #{relation_pred_forward.1} parent=1 // pred_check
      _
    $region3: #{relation_pred_forward.1} parent=1 // pred_check_branch
      %14 = sbr.rel (0) target = $region5
    $region4: #{relation_pred_forward.1} parent=1 // pred_region
      %s16 = ssub.s32 1152, 1152
      %17 = vsyncadd [#allocation3], %s16
      %s19 = sshll.u32 [#allocation2], 4
      %s20 = int_to_ptr.vmem [resolvable:$true] %s19
      %22 = dma.hbm_to_vmem [thread:$0]  %s0, 1152, %s20, [#allocation3]
    $region5: #{relation_pred_forward.1} parent=1 // pred_fallthru
      _
    // Predicated region
    $region6: #{relation_pred_forward.1} parent=1 // pred_check
      _
    $region7: #{relation_pred_forward.1} parent=1 // pred_check_branch
      %24 = sbr.rel (0) target = $region9
    $region8: #{relation_pred_forward.1} parent=1 // pred_region
      %s26 = ssub.s32 71680, 71680
      %27 = vsyncadd [#allocation6], %s26
      %s28 = sshll.u32 [#allocation5], 4
      %s29 = int_to_ptr.vmem [resolvable:$true] %s28
      %34 = dma.hbm_to_vmem [thread:$0]  %s1, 71680, %s29, [#allocation6], 512, 512, 32
    $region9: #{relation_pred_forward.1} parent=1 // pred_fallthru
      _
    // Predicated region
    $region10: #{relation_pred_forward.1} parent=1 // pred_check
      _
    $region11: #{relation_pred_forward.1} parent=1 // pred_check_branch
      %36 = sbr.rel (0) target = $region13
    $region12: #{relation_pred_forward.1} parent=1 // pred_region
      %s38 = ssub.s32 64, 64
      %39 = vsyncadd [#allocation6], %s38
      %s41 = sshll.u32 [#allocation7], 4
      %s42 = int_to_ptr.vmem [resolvable:$true] %s41
      %44 = dma.hbm_to_vmem [thread:$0]  %s2, 64, %s42, [#allocation6]
    $region13: #{relation_pred_forward.1} parent=1 // pred_fallthru
      _
    // Predicated region
    $region14: #{relation_pred_forward.1} parent=1 // pred_check
      _
    $region15: #{relation_pred_forward.1} parent=1 // pred_check_branch
      %46 = sbr.rel (0) target = $region17
    $region16: #{relation_pred_forward.1} parent=1 // pred_region
      _
    $region17: #{relation_pred_forward.1} parent=1 // pred_fallthru
      _
    // Predicated region
    $region18: #{relation_pred_forward.1} parent=1 // pred_check
      _
    $region19: #{relation_pred_forward.1} parent=1 // pred_check_branch
      %48 = sbr.rel (0) target = $region21
    $region20: #{relation_pred_forward.1} parent=1 // pred_region
      _
    $region21: #{relation_pred_forward.1} parent=1 // pred_fallthru
      _
    // Predicated region
    $region22: #{relation_pred_forward.1} parent=1 // pred_check
      _
    $region23: #{relation_pred_forward.1} parent=1 // pred_check_branch
      %50 = sbr.rel (0) target = $region25
    $region24: #{relation_pred_forward.1} parent=1 // pred_region
      %51 = dma.done [#allocation3], 1152
    $region25: #{relation_pred_forward.1} parent=1 // pred_fallthru
      _
    // Predicated region
    $region26: #{relation_pred_forward.1} parent=1 // pred_check
      _
    $region27: #{relation_pred_forward.1} parent=1 // pred_check_branch
      %53 = sbr.rel (0) target = $region29
    $region28: #{relation_pred_forward.1} parent=1 // pred_region
      %54 = dma.done [#allocation6], 71680
    $region29: #{relation_pred_forward.1} parent=1 // pred_fallthru
      _
    // Predicated region
    $region30: #{relation_pred_forward.1} parent=1 // pred_check
      _
    $region31: #{relation_pred_forward.1} parent=1 // pred_check_branch
      %56 = sbr.rel (0) target = $region33
    $region32: #{relation_pred_forward.1} parent=1 // pred_region
      %57 = dma.done [#allocation6], 64
    $region33: #{relation_pred_forward.1} parent=1 // pred_fallthru
      _
    %v58 = vld [vmem:[#allocation2] sm:$0xff]
    %v59 = vld [vmem:[#allocation2 + $0x8] sm:$0xff]
    %v60 = vld [vmem:[#allocation2 + $0x10] sm:$0xff]
    %v61 = vld [vmem:[#allocation2 + $0x18] sm:$0xff]
    %v62 = vld [vmem:[#allocation2 + $0x20] sm:$0xff]
    %v63 = vld [vmem:[#allocation2 + $0x28] sm:$0xff]
    %v64 = vld [vmem:[#allocation2 + $0x30] sm:$0xff]
    %v65 = vld [vmem:[#allocation2 + $0x38] sm:$0xff]
    %v66 = vld [vmem:[#allocation2 + $0x40] sm:$0xff]
    %v67 = vld [vmem:[#allocation5] sm:$0xff]
    %v68 = vld [vmem:[#allocation5 + $0x8] sm:$0xff]
    %v69 = vld [vmem:[#allocation5 + $0x10] sm:$0xff]
    %v70 = vld [vmem:[#allocation5 + $0x18] sm:$0xff]
    %v71 = vld [vmem:[#allocation5 + $0x20] sm:$0xff]
    %v72 = vld [vmem:[#allocation5 + $0x28] sm:$0xff]
    %v73 = vld [vmem:[#allocation5 + $0x30] sm:$0xff]
    %v74 = vld [vmem:[#allocation5 + $0x38] sm:$0xff]
    %v75 = vld [vmem:[#allocation5 + $0x40] sm:$0xff]
    %v76 = vld [vmem:[#allocation5 + $0x48] sm:$0xff]
    %v77 = vld [vmem:[#allocation5 + $0x50] sm:$0xff]
    %v78 = vld [vmem:[#allocation5 + $0x58] sm:$0xff]
    %v79 = vld [vmem:[#allocation5 + $0x60] sm:$0xff]
    %v80 = vld [vmem:[#allocation5 + $0x68] sm:$0xff]
    %v81 = vld [vmem:[#allocation5 + $0x70] sm:$0xff]
    %v82 = vld [vmem:[#allocation5 + $0x78] sm:$0xff]
    %v83 = vld [vmem:[#allocation5 + $0x80] sm:$0xff]
    %v84 = vld [vmem:[#allocation5 + $0x88] sm:$0xff]
    %v85 = vld [vmem:[#allocation5 + $0x90] sm:$0xff]
    %v86 = vld [vmem:[#allocation5 + $0x98] sm:$0xff]
    %v87 = vld [vmem:[#allocation5 + $0xa0] sm:$0xff]
    %v88 = vld [vmem:[#allocation5 + $0xa8] sm:$0xff]
    %v89 = vld [vmem:[#allocation5 + $0xb0] sm:$0xff]
    %v90 = vld [vmem:[#allocation5 + $0xb8] sm:$0xff]
    %v91 = vld [vmem:[#allocation5 + $0xc0] sm:$0xff]
    %v92 = vld [vmem:[#allocation5 + $0xc8] sm:$0xff]
    %v93 = vld [vmem:[#allocation5 + $0xd0] sm:$0xff]
    %v94 = vld [vmem:[#allocation5 + $0xd8] sm:$0xff]
    %v95 = vld [vmem:[#allocation5 + $0xe0] sm:$0xff]
    %v96 = vld [vmem:[#allocation5 + $0xe8] sm:$0xff]
    %v97 = vld [vmem:[#allocation5 + $0xf0] sm:$0xff]
    %v98 = vld [vmem:[#allocation5 + $0xf8] sm:$0xff]
    %v99 = vld [vmem:[#allocation5 + $0x100] sm:$0xff]
    %v100 = vld [vmem:[#allocation5 + $0x108] sm:$0xff]
    %v101 = vld [vmem:[#allocation5 + $0x110] sm:$0xff]
    %v102 = vld [vmem:[#allocation5 + $0x118] sm:$0xff]
    %v103 = vld [vmem:[#allocation5 + $0x120] sm:$0xff]
    %v104 = vld [vmem:[#allocation5 + $0x128] sm:$0xff]
    %v105 = vld [vmem:[#allocation5 + $0x130] sm:$0xff]
    %v106 = vld [vmem:[#allocation5 + $0x138] sm:$0xff]
    %v107 = vld [vmem:[#allocation5 + $0x140] sm:$0xff]
    %v108 = vld [vmem:[#allocation5 + $0x148] sm:$0xff]
    %v109 = vld [vmem:[#allocation5 + $0x150] sm:$0xff]
    %v110 = vld [vmem:[#allocation5 + $0x158] sm:$0xff]
    %v111 = vld [vmem:[#allocation5 + $0x160] sm:$0xff]
    %v112 = vld [vmem:[#allocation5 + $0x168] sm:$0xff]
    %v113 = vld [vmem:[#allocation5 + $0x170] sm:$0xff]
    %v114 = vld [vmem:[#allocation5 + $0x178] sm:$0xff]
    %v115 = vld [vmem:[#allocation5 + $0x180] sm:$0xff]
    %v116 = vld [vmem:[#allocation5 + $0x188] sm:$0xff]
    %v117 = vld [vmem:[#allocation5 + $0x190] sm:$0xff]
    %v118 = vld [vmem:[#allocation5 + $0x198] sm:$0xff]
    %v119 = vld [vmem:[#allocation5 + $0x1a0] sm:$0xff]
    %v120 = vld [vmem:[#allocation5 + $0x1a8] sm:$0xff]
    %v121 = vld [vmem:[#allocation5 + $0x1b0] sm:$0xff]
    %v122 = vld [vmem:[#allocation5 + $0x1b8] sm:$0xff]
    %v123 = vld [vmem:[#allocation5 + $0x1c0] sm:$0xff]
    %v124 = vld [vmem:[#allocation5 + $0x1c8] sm:$0xff]
    %v125 = vld [vmem:[#allocation5 + $0x1d0] sm:$0xff]
    %v126 = vld [vmem:[#allocation5 + $0x1d8] sm:$0xff]
    %v127 = vld [vmem:[#allocation5 + $0x1e0] sm:$0xff]
    %v128 = vld [vmem:[#allocation5 + $0x1e8] sm:$0xff]
    %v129 = vld [vmem:[#allocation5 + $0x1f0] sm:$0xff]
    %v130 = vld [vmem:[#allocation5 + $0x1f8] sm:$0xff]
    %v131 = vld [vmem:[#allocation5 + $0x200] sm:$0xff]
    %v132 = vld [vmem:[#allocation5 + $0x208] sm:$0xff]
    %v133 = vld [vmem:[#allocation5 + $0x210] sm:$0xff]
    %v134 = vld [vmem:[#allocation5 + $0x218] sm:$0xff]
    %v135 = vld [vmem:[#allocation5 + $0x220] sm:$0xff]
    %v136 = vld [vmem:[#allocation5 + $0x228] sm:$0xff]
    %v137 = vld [vmem:[#allocation5 + $0x230] sm:$0xff]
    %v138 = vld [vmem:[#allocation5 + $0x238] sm:$0xff]
    %v139 = vld [vmem:[#allocation5 + $0x240] sm:$0xff]
    %v140 = vld [vmem:[#allocation5 + $0x248] sm:$0xff]
    %v141 = vld [vmem:[#allocation5 + $0x250] sm:$0xff]
    %v142 = vld [vmem:[#allocation5 + $0x258] sm:$0xff]
    %v143 = vld [vmem:[#allocation5 + $0x260] sm:$0xff]
    %v144 = vld [vmem:[#allocation5 + $0x268] sm:$0xff]
    %v145 = vld [vmem:[#allocation5 + $0x270] sm:$0xff]
    %v146 = vld [vmem:[#allocation5 + $0x278] sm:$0xff]
    %v147 = vld [vmem:[#allocation5 + $0x280] sm:$0xff]
    %v148 = vld [vmem:[#allocation5 + $0x288] sm:$0xff]
    %v149 = vld [vmem:[#allocation5 + $0x290] sm:$0xff]
    %v150 = vld [vmem:[#allocation5 + $0x298] sm:$0xff]
    %v151 = vld [vmem:[#allocation5 + $0x2a0] sm:$0xff]
    %v152 = vld [vmem:[#allocation5 + $0x2a8] sm:$0xff]
    %v153 = vld [vmem:[#allocation5 + $0x2b0] sm:$0xff]
    %v154 = vld [vmem:[#allocation5 + $0x2b8] sm:$0xff]
    %v155 = vld [vmem:[#allocation5 + $0x2c0] sm:$0xff]
    %v156 = vld [vmem:[#allocation5 + $0x2c8] sm:$0xff]
    %v157 = vld [vmem:[#allocation5 + $0x2d0] sm:$0xff]
    %v158 = vld [vmem:[#allocation5 + $0x2d8] sm:$0xff]
    %v159 = vld [vmem:[#allocation5 + $0x2e0] sm:$0xff]
    %v160 = vld [vmem:[#allocation5 + $0x2e8] sm:$0xff]
    %v161 = vld [vmem:[#allocation5 + $0x2f0] sm:$0xff]
    %v162 = vld [vmem:[#allocation5 + $0x2f8] sm:$0xff]
    %v163 = vld [vmem:[#allocation5 + $0x300] sm:$0xff]
    %v164 = vld [vmem:[#allocation5 + $0x308] sm:$0xff]
    %v165 = vld [vmem:[#allocation5 + $0x310] sm:$0xff]
    %v166 = vld [vmem:[#allocation5 + $0x318] sm:$0xff]
    %v167 = vld [vmem:[#allocation5 + $0x320] sm:$0xff]
    %v168 = vld [vmem:[#allocation5 + $0x328] sm:$0xff]
    %v169 = vld [vmem:[#allocation5 + $0x330] sm:$0xff]
    %v170 = vld [vmem:[#allocation5 + $0x338] sm:$0xff]
    %v171 = vld [vmem:[#allocation5 + $0x340] sm:$0xff]
    %v172 = vld [vmem:[#allocation5 + $0x348] sm:$0xff]
    %v173 = vld [vmem:[#allocation5 + $0x350] sm:$0xff]
    %v174 = vld [vmem:[#allocation5 + $0x358] sm:$0xff]
    %v175 = vld [vmem:[#allocation5 + $0x360] sm:$0xff]
    %v176 = vld [vmem:[#allocation5 + $0x368] sm:$0xff]
    %v177 = vld [vmem:[#allocation5 + $0x370] sm:$0xff]
    %v178 = vld [vmem:[#allocation5 + $0x378] sm:$0xff]
    %v179 = vld [vmem:[#allocation5 + $0x380] sm:$0xff]
    %v180 = vld [vmem:[#allocation5 + $0x388] sm:$0xff]
    %v181 = vld [vmem:[#allocation5 + $0x390] sm:$0xff]
    %v182 = vld [vmem:[#allocation5 + $0x398] sm:$0xff]
    %v183 = vld [vmem:[#allocation5 + $0x3a0] sm:$0xff]
    %v184 = vld [vmem:[#allocation5 + $0x3a8] sm:$0xff]
    %v185 = vld [vmem:[#allocation5 + $0x3b0] sm:$0xff]
    %v186 = vld [vmem:[#allocation5 + $0x3b8] sm:$0xff]
    %v187 = vld [vmem:[#allocation5 + $0x3c0] sm:$0xff]
    %v188 = vld [vmem:[#allocation5 + $0x3c8] sm:$0xff]
    %v189 = vld [vmem:[#allocation5 + $0x3d0] sm:$0xff]
    %v190 = vld [vmem:[#allocation5 + $0x3d8] sm:$0xff]
    %v191 = vld [vmem:[#allocation5 + $0x3e0] sm:$0xff]
    %v192 = vld [vmem:[#allocation5 + $0x3e8] sm:$0xff]
    %v193 = vld [vmem:[#allocation5 + $0x3f0] sm:$0xff]
    %v194 = vld [vmem:[#allocation5 + $0x3f8] sm:$0xff]
    %v195 = vld [vmem:[#allocation5 + $0x400] sm:$0xff]
    %v196 = vld [vmem:[#allocation5 + $0x408] sm:$0xff]
    %v197 = vld [vmem:[#allocation5 + $0x410] sm:$0xff]
    %v198 = vld [vmem:[#allocation5 + $0x418] sm:$0xff]
    %v199 = vld [vmem:[#allocation5 + $0x420] sm:$0xff]
    %v200 = vld [vmem:[#allocation5 + $0x428] sm:$0xff]
    %v201 = vld [vmem:[#allocation5 + $0x430] sm:$0xff]
    %v202 = vld [vmem:[#allocation5 + $0x438] sm:$0xff]
    %v203 = vld [vmem:[#allocation5 + $0x440] sm:$0xff]
    %v204 = vld [vmem:[#allocation5 + $0x448] sm:$0xff]
    %v205 = vld [vmem:[#allocation5 + $0x450] sm:$0xff]
    %v206 = vld [vmem:[#allocation5 + $0x458] sm:$0xff]
    %v207 = vld [vmem:[#allocation5 + $0x460] sm:$0xff]
    %v208 = vld [vmem:[#allocation5 + $0x468] sm:$0xff]
    %v209 = vld [vmem:[#allocation5 + $0x470] sm:$0xff]
    %v210 = vld [vmem:[#allocation5 + $0x478] sm:$0xff]
    %v211 = vld [vmem:[#allocation5 + $0x480] sm:$0xff]
    %v212 = vld [vmem:[#allocation5 + $0x488] sm:$0xff]
    %v213 = vld [vmem:[#allocation5 + $0x490] sm:$0xff]
    %v214 = vld [vmem:[#allocation5 + $0x498] sm:$0xff]
    %v215 = vld [vmem:[#allocation5 + $0x4a0] sm:$0xff]
    %v216 = vld [vmem:[#allocation5 + $0x4a8] sm:$0xff]
    %v217 = vld [vmem:[#allocation5 + $0x4b0] sm:$0xff]
    %v218 = vld [vmem:[#allocation5 + $0x4b8] sm:$0xff]
    %v219 = vld [vmem:[#allocation5 + $0x4c0] sm:$0xff]
    %v220 = vld [vmem:[#allocation5 + $0x4c8] sm:$0xff]
    %v221 = vld [vmem:[#allocation5 + $0x4d0] sm:$0xff]
    %v222 = vld [vmem:[#allocation5 + $0x4d8] sm:$0xff]
    %v223 = vld [vmem:[#allocation5 + $0x4e0] sm:$0xff]
    %v224 = vld [vmem:[#allocation5 + $0x4e8] sm:$0xff]
    %v225 = vld [vmem:[#allocation5 + $0x4f0] sm:$0xff]
    %v226 = vld [vmem:[#allocation5 + $0x4f8] sm:$0xff]
    %v227 = vld [vmem:[#allocation5 + $0x500] sm:$0xff]
    %v228 = vld [vmem:[#allocation5 + $0x508] sm:$0xff]
    %v229 = vld [vmem:[#allocation5 + $0x510] sm:$0xff]
    %v230 = vld [vmem:[#allocation5 + $0x518] sm:$0xff]
    %v231 = vld [vmem:[#allocation5 + $0x520] sm:$0xff]
    %v232 = vld [vmem:[#allocation5 + $0x528] sm:$0xff]
    %v233 = vld [vmem:[#allocation5 + $0x530] sm:$0xff]
    %v234 = vld [vmem:[#allocation5 + $0x538] sm:$0xff]
    %v235 = vld [vmem:[#allocation5 + $0x540] sm:$0xff]
    %v236 = vld [vmem:[#allocation5 + $0x548] sm:$0xff]
    %v237 = vld [vmem:[#allocation5 + $0x550] sm:$0xff]
    %v238 = vld [vmem:[#allocation5 + $0x558] sm:$0xff]
    %v239 = vld [vmem:[#allocation5 + $0x560] sm:$0xff]
    %v240 = vld [vmem:[#allocation5 + $0x568] sm:$0xff]
    %v241 = vld [vmem:[#allocation5 + $0x570] sm:$0xff]
    %v242 = vld [vmem:[#allocation5 + $0x578] sm:$0xff]
    %v243 = vld [vmem:[#allocation5 + $0x580] sm:$0xff]
    %v244 = vld [vmem:[#allocation5 + $0x588] sm:$0xff]
    %v245 = vld [vmem:[#allocation5 + $0x590] sm:$0xff]
    %v246 = vld [vmem:[#allocation5 + $0x598] sm:$0xff]
    %v247 = vld [vmem:[#allocation5 + $0x5a0] sm:$0xff]
    %v248 = vld [vmem:[#allocation5 + $0x5a8] sm:$0xff]
    %v249 = vld [vmem:[#allocation5 + $0x5b0] sm:$0xff]
    %v250 = vld [vmem:[#allocation5 + $0x5b8] sm:$0xff]
    %v251 = vld [vmem:[#allocation5 + $0x5c0] sm:$0xff]
    %v252 = vld [vmem:[#allocation5 + $0x5c8] sm:$0xff]
    %v253 = vld [vmem:[#allocation5 + $0x5d0] sm:$0xff]
    %v254 = vld [vmem:[#allocation5 + $0x5d8] sm:$0xff]
    %v255 = vld [vmem:[#allocation5 + $0x5e0] sm:$0xff]
    %v256 = vld [vmem:[#allocation5 + $0x5e8] sm:$0xff]
    %v257 = vld [vmem:[#allocation5 + $0x5f0] sm:$0xff]
    %v258 = vld [vmem:[#allocation5 + $0x5f8] sm:$0xff]
    %v259 = vld [vmem:[#allocation5 + $0x600] sm:$0xff]
    %v260 = vld [vmem:[#allocation5 + $0x608] sm:$0xff]
    %v261 = vld [vmem:[#allocation5 + $0x610] sm:$0xff]
    %v262 = vld [vmem:[#allocation5 + $0x618] sm:$0xff]
    %v263 = vld [vmem:[#allocation5 + $0x620] sm:$0xff]
    %v264 = vld [vmem:[#allocation5 + $0x628] sm:$0xff]
    %v265 = vld [vmem:[#allocation5 + $0x630] sm:$0xff]
    %v266 = vld [vmem:[#allocation5 + $0x638] sm:$0xff]
    %v267 = vld [vmem:[#allocation5 + $0x640] sm:$0xff]
    %v268 = vld [vmem:[#allocation5 + $0x648] sm:$0xff]
    %v269 = vld [vmem:[#allocation5 + $0x650] sm:$0xff]
    %v270 = vld [vmem:[#allocation5 + $0x658] sm:$0xff]
    %v271 = vld [vmem:[#allocation5 + $0x660] sm:$0xff]
    %v272 = vld [vmem:[#allocation5 + $0x668] sm:$0xff]
    %v273 = vld [vmem:[#allocation5 + $0x670] sm:$0xff]
    %v274 = vld [vmem:[#allocation5 + $0x678] sm:$0xff]
    %v275 = vld [vmem:[#allocation5 + $0x680] sm:$0xff]
    %v276 = vld [vmem:[#allocation5 + $0x688] sm:$0xff]
    %v277 = vld [vmem:[#allocation5 + $0x690] sm:$0xff]
    %v278 = vld [vmem:[#allocation5 + $0x698] sm:$0xff]
    %v279 = vld [vmem:[#allocation5 + $0x6a0] sm:$0xff]
    %v280 = vld [vmem:[#allocation5 + $0x6a8] sm:$0xff]
    %v281 = vld [vmem:[#allocation5 + $0x6b0] sm:$0xff]
    %v282 = vld [vmem:[#allocation5 + $0x6b8] sm:$0xff]
    %v283 = vld [vmem:[#allocation5 + $0x6c0] sm:$0xff]
    %v284 = vld [vmem:[#allocation5 + $0x6c8] sm:$0xff]
    %v285 = vld [vmem:[#allocation5 + $0x6d0] sm:$0xff]
    %v286 = vld [vmem:[#allocation5 + $0x6d8] sm:$0xff]
    %v287 = vld [vmem:[#allocation5 + $0x6e0] sm:$0xff]
    %v288 = vld [vmem:[#allocation5 + $0x6e8] sm:$0xff]
    %v289 = vld [vmem:[#allocation5 + $0x6f0] sm:$0xff]
    %v290 = vld [vmem:[#allocation5 + $0x6f8] sm:$0xff]
    %v291 = vld [vmem:[#allocation5 + $0x700] sm:$0xff]
    %v292 = vld [vmem:[#allocation5 + $0x708] sm:$0xff]
    %v293 = vld [vmem:[#allocation5 + $0x710] sm:$0xff]
    %v294 = vld [vmem:[#allocation5 + $0x718] sm:$0xff]
    %v295 = vld [vmem:[#allocation5 + $0x720] sm:$0xff]
    %v296 = vld [vmem:[#allocation5 + $0x728] sm:$0xff]
    %v297 = vld [vmem:[#allocation5 + $0x730] sm:$0xff]
    %v298 = vld [vmem:[#allocation5 + $0x738] sm:$0xff]
    %v299 = vld [vmem:[#allocation5 + $0x740] sm:$0xff]
    %v300 = vld [vmem:[#allocation5 + $0x748] sm:$0xff]
    %v301 = vld [vmem:[#allocation5 + $0x750] sm:$0xff]
    %v302 = vld [vmem:[#allocation5 + $0x758] sm:$0xff]
    %v303 = vld [vmem:[#allocation5 + $0x760] sm:$0xff]
    %v304 = vld [vmem:[#allocation5 + $0x768] sm:$0xff]
    %v305 = vld [vmem:[#allocation5 + $0x770] sm:$0xff]
    %v306 = vld [vmem:[#allocation5 + $0x778] sm:$0xff]
    %v307 = vld [vmem:[#allocation5 + $0x780] sm:$0xff]
    %v308 = vld [vmem:[#allocation5 + $0x788] sm:$0xff]
    %v309 = vld [vmem:[#allocation5 + $0x790] sm:$0xff]
    %v310 = vld [vmem:[#allocation5 + $0x798] sm:$0xff]
    %v311 = vld [vmem:[#allocation5 + $0x7a0] sm:$0xff]
    %v312 = vld [vmem:[#allocation5 + $0x7a8] sm:$0xff]
    %v313 = vld [vmem:[#allocation5 + $0x7b0] sm:$0xff]
    %v314 = vld [vmem:[#allocation5 + $0x7b8] sm:$0xff]
    %v315 = vld [vmem:[#allocation5 + $0x7c0] sm:$0xff]
    %v316 = vld [vmem:[#allocation5 + $0x7c8] sm:$0xff]
    %v317 = vld [vmem:[#allocation5 + $0x7d0] sm:$0xff]
    %v318 = vld [vmem:[#allocation5 + $0x7d8] sm:$0xff]
    %v319 = vld [vmem:[#allocation5 + $0x7e0] sm:$0xff]
    %v320 = vld [vmem:[#allocation5 + $0x7e8] sm:$0xff]
    %v321 = vld [vmem:[#allocation5 + $0x7f0] sm:$0xff]
    %v322 = vld [vmem:[#allocation5 + $0x7f8] sm:$0xff]
    %v323 = vld [vmem:[#allocation5 + $0x800] sm:$0xff]
    %v324 = vld [vmem:[#allocation5 + $0x808] sm:$0xff]
    %v325 = vld [vmem:[#allocation5 + $0x810] sm:$0xff]
    %v326 = vld [vmem:[#allocation5 + $0x818] sm:$0xff]
    %v327 = vld [vmem:[#allocation5 + $0x820] sm:$0xff]
    %v328 = vld [vmem:[#allocation5 + $0x828] sm:$0xff]
    %v329 = vld [vmem:[#allocation5 + $0x830] sm:$0xff]
    %v330 = vld [vmem:[#allocation5 + $0x838] sm:$0xff]
    %v331 = vld [vmem:[#allocation5 + $0x840] sm:$0xff]
    %v332 = vld [vmem:[#allocation5 + $0x848] sm:$0xff]
    %v333 = vld [vmem:[#allocation5 + $0x850] sm:$0xff]
    %v334 = vld [vmem:[#allocation5 + $0x858] sm:$0xff]
    %v335 = vld [vmem:[#allocation5 + $0x860] sm:$0xff]
    %v336 = vld [vmem:[#allocation5 + $0x868] sm:$0xff]
    %v337 = vld [vmem:[#allocation5 + $0x870] sm:$0xff]
    %v338 = vld [vmem:[#allocation5 + $0x878] sm:$0xff]
    %v339 = vld [vmem:[#allocation5 + $0x880] sm:$0xff]
    %v340 = vld [vmem:[#allocation5 + $0x888] sm:$0xff]
    %v341 = vld [vmem:[#allocation5 + $0x890] sm:$0xff]
    %v342 = vld [vmem:[#allocation5 + $0x898] sm:$0xff]
    %v343 = vld [vmem:[#allocation5 + $0x8a0] sm:$0xff]
    %v344 = vld [vmem:[#allocation5 + $0x8a8] sm:$0xff]
    %v345 = vld [vmem:[#allocation5 + $0x8b0] sm:$0xff]
    %v346 = vld [vmem:[#allocation5 + $0x8b8] sm:$0xff]
    %v347 = vld [vmem:[#allocation5 + $0x8c0] sm:$0xff]
    %v348 = vld [vmem:[#allocation5 + $0x8c8] sm:$0xff]
    %v349 = vld [vmem:[#allocation5 + $0x8d0] sm:$0xff]
    %v350 = vld [vmem:[#allocation5 + $0x8d8] sm:$0xff]
    %v351 = vld [vmem:[#allocation5 + $0x8e0] sm:$0xff]
    %v352 = vld [vmem:[#allocation5 + $0x8e8] sm:$0xff]
    %v353 = vld [vmem:[#allocation5 + $0x8f0] sm:$0xff]
    %v354 = vld [vmem:[#allocation5 + $0x8f8] sm:$0xff]
    %v355 = vld [vmem:[#allocation5 + $0x900] sm:$0xff]
    %v356 = vld [vmem:[#allocation5 + $0x908] sm:$0xff]
    %v357 = vld [vmem:[#allocation5 + $0x910] sm:$0xff]
    %v358 = vld [vmem:[#allocation5 + $0x918] sm:$0xff]
    %v359 = vld [vmem:[#allocation5 + $0x920] sm:$0xff]
    %v360 = vld [vmem:[#allocation5 + $0x928] sm:$0xff]
    %v361 = vld [vmem:[#allocation5 + $0x930] sm:$0xff]
    %v362 = vld [vmem:[#allocation5 + $0x938] sm:$0xff]
    %v363 = vld [vmem:[#allocation5 + $0x940] sm:$0xff]
    %v364 = vld [vmem:[#allocation5 + $0x948] sm:$0xff]
    %v365 = vld [vmem:[#allocation5 + $0x950] sm:$0xff]
    %v366 = vld [vmem:[#allocation5 + $0x958] sm:$0xff]
    %v367 = vld [vmem:[#allocation5 + $0x960] sm:$0xff]
    %v368 = vld [vmem:[#allocation5 + $0x968] sm:$0xff]
    %v369 = vld [vmem:[#allocation5 + $0x970] sm:$0xff]
    %v370 = vld [vmem:[#allocation5 + $0x978] sm:$0xff]
    %v371 = vld [vmem:[#allocation5 + $0x980] sm:$0xff]
    %v372 = vld [vmem:[#allocation5 + $0x988] sm:$0xff]
    %v373 = vld [vmem:[#allocation5 + $0x990] sm:$0xff]
    %v374 = vld [vmem:[#allocation5 + $0x998] sm:$0xff]
    %v375 = vld [vmem:[#allocation5 + $0x9a0] sm:$0xff]
    %v376 = vld [vmem:[#allocation5 + $0x9a8] sm:$0xff]
    %v377 = vld [vmem:[#allocation5 + $0x9b0] sm:$0xff]
    %v378 = vld [vmem:[#allocation5 + $0x9b8] sm:$0xff]
    %v379 = vld [vmem:[#allocation5 + $0x9c0] sm:$0xff]
    %v380 = vld [vmem:[#allocation5 + $0x9c8] sm:$0xff]
    %v381 = vld [vmem:[#allocation5 + $0x9d0] sm:$0xff]
    %v382 = vld [vmem:[#allocation5 + $0x9d8] sm:$0xff]
    %v383 = vld [vmem:[#allocation5 + $0x9e0] sm:$0xff]
    %v384 = vld [vmem:[#allocation5 + $0x9e8] sm:$0xff]
    %v385 = vld [vmem:[#allocation5 + $0x9f0] sm:$0xff]
    %v386 = vld [vmem:[#allocation5 + $0x9f8] sm:$0xff]
    %v387 = vld [vmem:[#allocation5 + $0xa00] sm:$0xff]
    %v388 = vld [vmem:[#allocation5 + $0xa08] sm:$0xff]
    %v389 = vld [vmem:[#allocation5 + $0xa10] sm:$0xff]
    %v390 = vld [vmem:[#allocation5 + $0xa18] sm:$0xff]
    %v391 = vld [vmem:[#allocation5 + $0xa20] sm:$0xff]
    %v392 = vld [vmem:[#allocation5 + $0xa28] sm:$0xff]
    %v393 = vld [vmem:[#allocation5 + $0xa30] sm:$0xff]
    %v394 = vld [vmem:[#allocation5 + $0xa38] sm:$0xff]
    %v395 = vld [vmem:[#allocation5 + $0xa40] sm:$0xff]
    %v396 = vld [vmem:[#allocation5 + $0xa48] sm:$0xff]
    %v397 = vld [vmem:[#allocation5 + $0xa50] sm:$0xff]
    %v398 = vld [vmem:[#allocation5 + $0xa58] sm:$0xff]
    %v399 = vld [vmem:[#allocation5 + $0xa60] sm:$0xff]
    %v400 = vld [vmem:[#allocation5 + $0xa68] sm:$0xff]
    %v401 = vld [vmem:[#allocation5 + $0xa70] sm:$0xff]
    %v402 = vld [vmem:[#allocation5 + $0xa78] sm:$0xff]
    %v403 = vld [vmem:[#allocation5 + $0xa80] sm:$0xff]
    %v404 = vld [vmem:[#allocation5 + $0xa88] sm:$0xff]
    %v405 = vld [vmem:[#allocation5 + $0xa90] sm:$0xff]
    %v406 = vld [vmem:[#allocation5 + $0xa98] sm:$0xff]
    %v407 = vld [vmem:[#allocation5 + $0xaa0] sm:$0xff]
    %v408 = vld [vmem:[#allocation5 + $0xaa8] sm:$0xff]
    %v409 = vld [vmem:[#allocation5 + $0xab0] sm:$0xff]
    %v410 = vld [vmem:[#allocation5 + $0xab8] sm:$0xff]
    %v411 = vld [vmem:[#allocation5 + $0xac0] sm:$0xff]
    %v412 = vld [vmem:[#allocation5 + $0xac8] sm:$0xff]
    %v413 = vld [vmem:[#allocation5 + $0xad0] sm:$0xff]
    %v414 = vld [vmem:[#allocation5 + $0xad8] sm:$0xff]
    %v415 = vld [vmem:[#allocation5 + $0xae0] sm:$0xff]
    %v416 = vld [vmem:[#allocation5 + $0xae8] sm:$0xff]
    %v417 = vld [vmem:[#allocation5 + $0xaf0] sm:$0xff]
    %v418 = vld [vmem:[#allocation5 + $0xaf8] sm:$0xff]
    %v419 = vld [vmem:[#allocation5 + $0xb00] sm:$0xff]
    %v420 = vld [vmem:[#allocation5 + $0xb08] sm:$0xff]
    %v421 = vld [vmem:[#allocation5 + $0xb10] sm:$0xff]
    %v422 = vld [vmem:[#allocation5 + $0xb18] sm:$0xff]
    %v423 = vld [vmem:[#allocation5 + $0xb20] sm:$0xff]
    %v424 = vld [vmem:[#allocation5 + $0xb28] sm:$0xff]
    %v425 = vld [vmem:[#allocation5 + $0xb30] sm:$0xff]
    %v426 = vld [vmem:[#allocation5 + $0xb38] sm:$0xff]
    %v427 = vld [vmem:[#allocation5 + $0xb40] sm:$0xff]
    %v428 = vld [vmem:[#allocation5 + $0xb48] sm:$0xff]
    %v429 = vld [vmem:[#allocation5 + $0xb50] sm:$0xff]
    %v430 = vld [vmem:[#allocation5 + $0xb58] sm:$0xff]
    %v431 = vld [vmem:[#allocation5 + $0xb60] sm:$0xff]
    %v432 = vld [vmem:[#allocation5 + $0xb68] sm:$0xff]
    %v433 = vld [vmem:[#allocation5 + $0xb70] sm:$0xff]
    %v434 = vld [vmem:[#allocation5 + $0xb78] sm:$0xff]
    %v435 = vld [vmem:[#allocation5 + $0xb80] sm:$0xff]
    %v436 = vld [vmem:[#allocation5 + $0xb88] sm:$0xff]
    %v437 = vld [vmem:[#allocation5 + $0xb90] sm:$0xff]
    %v438 = vld [vmem:[#allocation5 + $0xb98] sm:$0xff]
    %v439 = vld [vmem:[#allocation5 + $0xba0] sm:$0xff]
    %v440 = vld [vmem:[#allocation5 + $0xba8] sm:$0xff]
    %v441 = vld [vmem:[#allocation5 + $0xbb0] sm:$0xff]
    %v442 = vld [vmem:[#allocation5 + $0xbb8] sm:$0xff]
    %v443 = vld [vmem:[#allocation5 + $0xbc0] sm:$0xff]
    %v444 = vld [vmem:[#allocation5 + $0xbc8] sm:$0xff]
    %v445 = vld [vmem:[#allocation5 + $0xbd0] sm:$0xff]
    %v446 = vld [vmem:[#allocation5 + $0xbd8] sm:$0xff]
    %v447 = vld [vmem:[#allocation5 + $0xbe0] sm:$0xff]
    %v448 = vld [vmem:[#allocation5 + $0xbe8] sm:$0xff]
    %v449 = vld [vmem:[#allocation5 + $0xbf0] sm:$0xff]
    %v450 = vld [vmem:[#allocation5 + $0xbf8] sm:$0xff]
    %v451 = vld [vmem:[#allocation5 + $0xc00] sm:$0xff]
    %v452 = vld [vmem:[#allocation5 + $0xc08] sm:$0xff]
    %v453 = vld [vmem:[#allocation5 + $0xc10] sm:$0xff]
    %v454 = vld [vmem:[#allocation5 + $0xc18] sm:$0xff]
    %v455 = vld [vmem:[#allocation5 + $0xc20] sm:$0xff]
    %v456 = vld [vmem:[#allocation5 + $0xc28] sm:$0xff]
    %v457 = vld [vmem:[#allocation5 + $0xc30] sm:$0xff]
    %v458 = vld [vmem:[#allocation5 + $0xc38] sm:$0xff]
    %v459 = vld [vmem:[#allocation5 + $0xc40] sm:$0xff]
    %v460 = vld [vmem:[#allocation5 + $0xc48] sm:$0xff]
    %v461 = vld [vmem:[#allocation5 + $0xc50] sm:$0xff]
    %v462 = vld [vmem:[#allocation5 + $0xc58] sm:$0xff]
    %v463 = vld [vmem:[#allocation5 + $0xc60] sm:$0xff]
    %v464 = vld [vmem:[#allocation5 + $0xc68] sm:$0xff]
    %v465 = vld [vmem:[#allocation5 + $0xc70] sm:$0xff]
    %v466 = vld [vmem:[#allocation5 + $0xc78] sm:$0xff]
    %v467 = vld [vmem:[#allocation5 + $0xc80] sm:$0xff]
    %v468 = vld [vmem:[#allocation5 + $0xc88] sm:$0xff]
    %v469 = vld [vmem:[#allocation5 + $0xc90] sm:$0xff]
    %v470 = vld [vmem:[#allocation5 + $0xc98] sm:$0xff]
    %v471 = vld [vmem:[#allocation5 + $0xca0] sm:$0xff]
    %v472 = vld [vmem:[#allocation5 + $0xca8] sm:$0xff]
    %v473 = vld [vmem:[#allocation5 + $0xcb0] sm:$0xff]
    %v474 = vld [vmem:[#allocation5 + $0xcb8] sm:$0xff]
    %v475 = vld [vmem:[#allocation5 + $0xcc0] sm:$0xff]
    %v476 = vld [vmem:[#allocation5 + $0xcc8] sm:$0xff]
    %v477 = vld [vmem:[#allocation5 + $0xcd0] sm:$0xff]
    %v478 = vld [vmem:[#allocation5 + $0xcd8] sm:$0xff]
    %v479 = vld [vmem:[#allocation5 + $0xce0] sm:$0xff]
    %v480 = vld [vmem:[#allocation5 + $0xce8] sm:$0xff]
    %v481 = vld [vmem:[#allocation5 + $0xcf0] sm:$0xff]
    %v482 = vld [vmem:[#allocation5 + $0xcf8] sm:$0xff]
    %v483 = vld [vmem:[#allocation5 + $0xd00] sm:$0xff]
    %v484 = vld [vmem:[#allocation5 + $0xd08] sm:$0xff]
    %v485 = vld [vmem:[#allocation5 + $0xd10] sm:$0xff]
    %v486 = vld [vmem:[#allocation5 + $0xd18] sm:$0xff]
    %v487 = vld [vmem:[#allocation5 + $0xd20] sm:$0xff]
    %v488 = vld [vmem:[#allocation5 + $0xd28] sm:$0xff]
    %v489 = vld [vmem:[#allocation5 + $0xd30] sm:$0xff]
    %v490 = vld [vmem:[#allocation5 + $0xd38] sm:$0xff]
    %v491 = vld [vmem:[#allocation5 + $0xd40] sm:$0xff]
    %v492 = vld [vmem:[#allocation5 + $0xd48] sm:$0xff]
    %v493 = vld [vmem:[#allocation5 + $0xd50] sm:$0xff]
    %v494 = vld [vmem:[#allocation5 + $0xd58] sm:$0xff]
    %v495 = vld [vmem:[#allocation5 + $0xd60] sm:$0xff]
    %v496 = vld [vmem:[#allocation5 + $0xd68] sm:$0xff]
    %v497 = vld [vmem:[#allocation5 + $0xd70] sm:$0xff]
    %v498 = vld [vmem:[#allocation5 + $0xd78] sm:$0xff]
    %v499 = vld [vmem:[#allocation5 + $0xd80] sm:$0xff]
    %v500 = vld [vmem:[#allocation5 + $0xd88] sm:$0xff]
    %v501 = vld [vmem:[#allocation5 + $0xd90] sm:$0xff]
    %v502 = vld [vmem:[#allocation5 + $0xd98] sm:$0xff]
    %v503 = vld [vmem:[#allocation5 + $0xda0] sm:$0xff]
    %v504 = vld [vmem:[#allocation5 + $0xda8] sm:$0xff]
    %v505 = vld [vmem:[#allocation5 + $0xdb0] sm:$0xff]
    %v506 = vld [vmem:[#allocation5 + $0xdb8] sm:$0xff]
    %v507 = vld [vmem:[#allocation5 + $0xdc0] sm:$0xff]
    %v508 = vld [vmem:[#allocation5 + $0xdc8] sm:$0xff]
    %v509 = vld [vmem:[#allocation5 + $0xdd0] sm:$0xff]
    %v510 = vld [vmem:[#allocation5 + $0xdd8] sm:$0xff]
    %v511 = vld [vmem:[#allocation5 + $0xde0] sm:$0xff]
    %v512 = vld [vmem:[#allocation5 + $0xde8] sm:$0xff]
    %v513 = vld [vmem:[#allocation5 + $0xdf0] sm:$0xff]
    %v514 = vld [vmem:[#allocation5 + $0xdf8] sm:$0xff]
    %v515 = vld [vmem:[#allocation5 + $0xe00] sm:$0xff]
    %v516 = vld [vmem:[#allocation5 + $0xe08] sm:$0xff]
    %v517 = vld [vmem:[#allocation5 + $0xe10] sm:$0xff]
    %v518 = vld [vmem:[#allocation5 + $0xe18] sm:$0xff]
    %v519 = vld [vmem:[#allocation5 + $0xe20] sm:$0xff]
    %v520 = vld [vmem:[#allocation5 + $0xe28] sm:$0xff]
    %v521 = vld [vmem:[#allocation5 + $0xe30] sm:$0xff]
    %v522 = vld [vmem:[#allocation5 + $0xe38] sm:$0xff]
    %v523 = vld [vmem:[#allocation5 + $0xe40] sm:$0xff]
    %v524 = vld [vmem:[#allocation5 + $0xe48] sm:$0xff]
    %v525 = vld [vmem:[#allocation5 + $0xe50] sm:$0xff]
    %v526 = vld [vmem:[#allocation5 + $0xe58] sm:$0xff]
    %v527 = vld [vmem:[#allocation5 + $0xe60] sm:$0xff]
    %v528 = vld [vmem:[#allocation5 + $0xe68] sm:$0xff]
    %v529 = vld [vmem:[#allocation5 + $0xe70] sm:$0xff]
    %v530 = vld [vmem:[#allocation5 + $0xe78] sm:$0xff]
    %v531 = vld [vmem:[#allocation5 + $0xe80] sm:$0xff]
    %v532 = vld [vmem:[#allocation5 + $0xe88] sm:$0xff]
    %v533 = vld [vmem:[#allocation5 + $0xe90] sm:$0xff]
    %v534 = vld [vmem:[#allocation5 + $0xe98] sm:$0xff]
    %v535 = vld [vmem:[#allocation5 + $0xea0] sm:$0xff]
    %v536 = vld [vmem:[#allocation5 + $0xea8] sm:$0xff]
    %v537 = vld [vmem:[#allocation5 + $0xeb0] sm:$0xff]
    %v538 = vld [vmem:[#allocation5 + $0xeb8] sm:$0xff]
    %v539 = vld [vmem:[#allocation5 + $0xec0] sm:$0xff]
    %v540 = vld [vmem:[#allocation5 + $0xec8] sm:$0xff]
    %v541 = vld [vmem:[#allocation5 + $0xed0] sm:$0xff]
    %v542 = vld [vmem:[#allocation5 + $0xed8] sm:$0xff]
    %v543 = vld [vmem:[#allocation5 + $0xee0] sm:$0xff]
    %v544 = vld [vmem:[#allocation5 + $0xee8] sm:$0xff]
    %v545 = vld [vmem:[#allocation5 + $0xef0] sm:$0xff]
    %v546 = vld [vmem:[#allocation5 + $0xef8] sm:$0xff]
    %v547 = vld [vmem:[#allocation5 + $0xf00] sm:$0xff]
    %v548 = vld [vmem:[#allocation5 + $0xf08] sm:$0xff]
    %v549 = vld [vmem:[#allocation5 + $0xf10] sm:$0xff]
    %v550 = vld [vmem:[#allocation5 + $0xf18] sm:$0xff]
    %v551 = vld [vmem:[#allocation5 + $0xf20] sm:$0xff]
    %v552 = vld [vmem:[#allocation5 + $0xf28] sm:$0xff]
    %v553 = vld [vmem:[#allocation5 + $0xf30] sm:$0xff]
    %v554 = vld [vmem:[#allocation5 + $0xf38] sm:$0xff]
    %v555 = vld [vmem:[#allocation5 + $0xf40] sm:$0xff]
    %v556 = vld [vmem:[#allocation5 + $0xf48] sm:$0xff]
    %v557 = vld [vmem:[#allocation5 + $0xf50] sm:$0xff]
    %v558 = vld [vmem:[#allocation5 + $0xf58] sm:$0xff]
    %v559 = vld [vmem:[#allocation5 + $0xf60] sm:$0xff]
    %v560 = vld [vmem:[#allocation5 + $0xf68] sm:$0xff]
    %v561 = vld [vmem:[#allocation5 + $0xf70] sm:$0xff]
    %v562 = vld [vmem:[#allocation5 + $0xf78] sm:$0xff]
    %v563 = vld [vmem:[#allocation5 + $0xf80] sm:$0xff]
    %v564 = vld [vmem:[#allocation5 + $0xf88] sm:$0xff]
    %v565 = vld [vmem:[#allocation5 + $0xf90] sm:$0xff]
    %v566 = vld [vmem:[#allocation5 + $0xf98] sm:$0xff]
    %v567 = vld [vmem:[#allocation5 + $0xfa0] sm:$0xff]
    %v568 = vld [vmem:[#allocation5 + $0xfa8] sm:$0xff]
    %v569 = vld [vmem:[#allocation5 + $0xfb0] sm:$0xff]
    %v570 = vld [vmem:[#allocation5 + $0xfb8] sm:$0xff]
    %v571 = vld [vmem:[#allocation5 + $0xfc0] sm:$0xff]
    %v572 = vld [vmem:[#allocation5 + $0xfc8] sm:$0xff]
    %v573 = vld [vmem:[#allocation5 + $0xfd0] sm:$0xff]
    %v574 = vld [vmem:[#allocation5 + $0xfd8] sm:$0xff]
    %v575 = vld [vmem:[#allocation5 + $0xfe0] sm:$0xff]
    %v576 = vld [vmem:[#allocation5 + $0xfe8] sm:$0xff]
    %v577 = vld [vmem:[#allocation5 + $0xff0] sm:$0xff]
    %v578 = vld [vmem:[#allocation5 + $0xff8] sm:$0xff]
    %v579 = vld [vmem:[#allocation5 + $0x1000] sm:$0xff]
    %v580 = vld [vmem:[#allocation5 + $0x1008] sm:$0xff]
    %v581 = vld [vmem:[#allocation5 + $0x1010] sm:$0xff]
    %v582 = vld [vmem:[#allocation5 + $0x1018] sm:$0xff]
    %v583 = vld [vmem:[#allocation5 + $0x1020] sm:$0xff]
    %v584 = vld [vmem:[#allocation5 + $0x1028] sm:$0xff]
    %v585 = vld [vmem:[#allocation5 + $0x1030] sm:$0xff]
    %v586 = vld [vmem:[#allocation5 + $0x1038] sm:$0xff]
    %v587 = vld [vmem:[#allocation5 + $0x1040] sm:$0xff]
    %v588 = vld [vmem:[#allocation5 + $0x1048] sm:$0xff]
    %v589 = vld [vmem:[#allocation5 + $0x1050] sm:$0xff]
    %v590 = vld [vmem:[#allocation5 + $0x1058] sm:$0xff]
    %v591 = vld [vmem:[#allocation5 + $0x1060] sm:$0xff]
    %v592 = vld [vmem:[#allocation5 + $0x1068] sm:$0xff]
    %v593 = vld [vmem:[#allocation5 + $0x1070] sm:$0xff]
    %v594 = vld [vmem:[#allocation5 + $0x1078] sm:$0xff]
    %v595 = vld [vmem:[#allocation5 + $0x1080] sm:$0xff]
    %v596 = vld [vmem:[#allocation5 + $0x1088] sm:$0xff]
    %v597 = vld [vmem:[#allocation5 + $0x1090] sm:$0xff]
    %v598 = vld [vmem:[#allocation5 + $0x1098] sm:$0xff]
    %v599 = vld [vmem:[#allocation5 + $0x10a0] sm:$0xff]
    %v600 = vld [vmem:[#allocation5 + $0x10a8] sm:$0xff]
    %v601 = vld [vmem:[#allocation5 + $0x10b0] sm:$0xff]
    %v602 = vld [vmem:[#allocation5 + $0x10b8] sm:$0xff]
    %v603 = vld [vmem:[#allocation5 + $0x10c0] sm:$0xff]
    %v604 = vld [vmem:[#allocation5 + $0x10c8] sm:$0xff]
    %v605 = vld [vmem:[#allocation5 + $0x10d0] sm:$0xff]
    %v606 = vld [vmem:[#allocation5 + $0x10d8] sm:$0xff]
    %v607 = vld [vmem:[#allocation5 + $0x10e0] sm:$0xff]
    %v608 = vld [vmem:[#allocation5 + $0x10e8] sm:$0xff]
    %v609 = vld [vmem:[#allocation5 + $0x10f0] sm:$0xff]
    %v610 = vld [vmem:[#allocation5 + $0x10f8] sm:$0xff]
    %v611 = vld [vmem:[#allocation5 + $0x1100] sm:$0xff]
    %v612 = vld [vmem:[#allocation5 + $0x1108] sm:$0xff]
    %v613 = vld [vmem:[#allocation5 + $0x1110] sm:$0xff]
    %v614 = vld [vmem:[#allocation5 + $0x1118] sm:$0xff]
    %v615 = vld [vmem:[#allocation5 + $0x1120] sm:$0xff]
    %v616 = vld [vmem:[#allocation5 + $0x1128] sm:$0xff]
    %v617 = vld [vmem:[#allocation5 + $0x1130] sm:$0xff]
    %v618 = vld [vmem:[#allocation5 + $0x1138] sm:$0xff]
    %v619 = vld [vmem:[#allocation5 + $0x1140] sm:$0xff]
    %v620 = vld [vmem:[#allocation5 + $0x1148] sm:$0xff]
    %v621 = vld [vmem:[#allocation5 + $0x1150] sm:$0xff]
    %v622 = vld [vmem:[#allocation5 + $0x1158] sm:$0xff]
    %v623 = vld [vmem:[#allocation5 + $0x1160] sm:$0xff]
    %v624 = vld [vmem:[#allocation5 + $0x1168] sm:$0xff]
    %v625 = vld [vmem:[#allocation5 + $0x1170] sm:$0xff]
    %v626 = vld [vmem:[#allocation5 + $0x1178] sm:$0xff]
    %v627 = vld [vmem:[#allocation7] sm:$0xf]
    %v629 = vlaneseq
    %v630 = vshrl.u32 %v629, 7
    %v631 = vsub.s32 0, %v630
    %v632 = vrot.slane %v627, %v631
    %v633 = vlaneseq
    %v634 = vshrl.u32 %v633, 7
    %v635 = vsub.s32 1, %v634
    %v636 = vrot.slane %v627, %v635
    %v637 = vlaneseq
    %v638 = vshrl.u32 %v637, 7
    %v639 = vsub.s32 2, %v638
    %v640 = vrot.slane %v627, %v639
    %v641 = vlaneseq
    %v642 = vshrl.u32 %v641, 7
    %v643 = vsub.s32 3, %v642
    %v644 = vrot.slane %v627, %v643
    %vm649 = vcmask 785408
    %v651 = vsel %vm649, %v66, 0
    %653 = vmatprep.subr.mxu0 %v68
    %654 = vmatpush1.msra.mxu0 %v67
    %655 = vmatprep.subr.mxu0 %v72
    %656 = vmatpush1.msra.mxu0 %v71
    %657 = vmatprep.subr.mxu0 %v76
    %658 = vmatpush1.msra.mxu0 %v75
    %659 = vmatprep.subr.mxu0 %v80
    %660 = vmatpush1.msra.mxu0 %v79
    %661 = vmatprep.subr.mxu0 %v84
    %662 = vmatpush1.msra.mxu0 %v83
    %663 = vmatprep.subr.mxu0 %v88
    %664 = vmatpush1.msra.mxu0 %v87
    %665 = vmatprep.subr.mxu0 %v92
    %666 = vmatpush1.msra.mxu0 %v91
    %667 = vmatprep.subr.mxu0 %v96
    %668 = vmatpush1.msra.mxu0 %v95
    %669 = vmatprep.subr.mxu0 %v100
    %670 = vmatpush1.msra.mxu0 %v99
    %671 = vmatprep.subr.mxu0 %v104
    %672 = vmatpush1.msra.mxu0 %v103
    %673 = vmatprep.subr.mxu0 %v108
    %674 = vmatpush1.msra.mxu0 %v107
    %675 = vmatprep.subr.mxu0 %v112
    %676 = vmatpush1.msra.mxu0 %v111
    %677 = vmatprep.subr.mxu0 %v116
    %678 = vmatpush1.msra.mxu0 %v115
    %679 = vmatprep.subr.mxu0 %v120
    %680 = vmatpush1.msra.mxu0 %v119
    %681 = vmatprep.subr.mxu0 %v124
    %682 = vmatpush1.msra.mxu0 %v123
    %683 = vmatprep.subr.mxu0 %v128
    %684 = vmatpush1.msra.mxu0 %v127
    %685 = vmatprep.subr.mxu0 %v132
    %686 = vmatpush1.msra.mxu0 %v131
    %687 = vmatprep.subr.mxu0 %v136
    %688 = vmatpush1.msra.mxu0 %v135
    %689 = vmatprep.subr.mxu0 %v140
    %690 = vmatpush1.msra.mxu0 %v139
    %691 = vmatprep.subr.mxu0 %v144
    %692 = vmatpush1.msra.mxu0 %v143
    %693 = vmatprep.subr.mxu0 %v148
    %694 = vmatpush1.msra.mxu0 %v147
    %695 = vmatprep.subr.mxu0 %v152
    %696 = vmatpush1.msra.mxu0 %v151
    %697 = vmatprep.subr.mxu0 %v156
    %698 = vmatpush1.msra.mxu0 %v155
    %699 = vmatprep.subr.mxu0 %v160
    %700 = vmatpush1.msra.mxu0 %v159
    %701 = vmatprep.subr.mxu0 %v164
    %702 = vmatpush1.msra.mxu0 %v163
    %703 = vmatprep.subr.mxu0 %v168
    %704 = vmatpush1.msra.mxu0 %v167
    %705 = vmatprep.subr.mxu0 %v172
    %706 = vmatpush1.msra.mxu0 %v171
    %707 = vmatprep.subr.mxu0 %v176
    %708 = vmatpush1.msra.mxu0 %v175
    %709 = vmatprep.subr.mxu0 %v180
    %710 = vmatpush1.msra.mxu0 %v179
    %711 = vmatprep.subr.mxu0 %v184
    %712 = vmatpush1.msra.mxu0 %v183
    %713 = vmatprep.subr.mxu0 %v188
    %714 = vmatpush1.msra.mxu0 %v187
    %715 = vmatprep.subr.mxu0 %v192
    %716 = vmatpush1.msra.mxu0 %v191
    %717 = vmatprep.mubr.f32.mxu0 %v59
    %718 = vmatmul.mubr.f32.gmra.mrb[0].mxu0 %v58
    %v719 = vpop.f32.mrb[0].mxu0
    %v720 = vadd.f32 %v632, %v719
    %v721 = vpop.f32.mrb[0].mxu0
    %v722 = vadd.f32 %v636, %v721
    %723 = vdwg.mxu0
    %724 = vmatprep.subr.mxu0 %v196
    %725 = vmatpush1.msra.mxu0 %v195
    %726 = vmatprep.subr.mxu0 %v200
    %727 = vmatpush1.msra.mxu0 %v199
    %728 = vmatprep.subr.mxu0 %v204
    %729 = vmatpush1.msra.mxu0 %v203
    %730 = vmatprep.subr.mxu0 %v208
    %731 = vmatpush1.msra.mxu0 %v207
    %732 = vmatprep.subr.mxu0 %v212
    %733 = vmatpush1.msra.mxu0 %v211
    %734 = vmatprep.subr.mxu0 %v216
    %735 = vmatpush1.msra.mxu0 %v215
    %736 = vmatprep.subr.mxu0 %v220
    %737 = vmatpush1.msra.mxu0 %v219
    %738 = vmatprep.subr.mxu0 %v224
    %739 = vmatpush1.msra.mxu0 %v223
    %740 = vmatprep.subr.mxu0 %v228
    %741 = vmatpush1.msra.mxu0 %v227
    %742 = vmatprep.subr.mxu0 %v232
    %743 = vmatpush1.msra.mxu0 %v231
    %744 = vmatprep.subr.mxu0 %v236
    %745 = vmatpush1.msra.mxu0 %v235
    %746 = vmatprep.subr.mxu0 %v240
    %747 = vmatpush1.msra.mxu0 %v239
    %748 = vmatprep.subr.mxu0 %v244
    %749 = vmatpush1.msra.mxu0 %v243
    %750 = vmatprep.subr.mxu0 %v248
    %751 = vmatpush1.msra.mxu0 %v247
    %752 = vmatprep.subr.mxu0 %v252
    %753 = vmatpush1.msra.mxu0 %v251
    %754 = vmatprep.subr.mxu0 %v256
    %755 = vmatpush1.msra.mxu0 %v255
    %756 = vmatprep.subr.mxu0 %v260
    %757 = vmatpush1.msra.mxu0 %v259
    %758 = vmatprep.subr.mxu0 %v264
    %759 = vmatpush1.msra.mxu0 %v263
    %760 = vmatprep.subr.mxu0 %v268
    %761 = vmatpush1.msra.mxu0 %v267
    %762 = vmatprep.subr.mxu0 %v272
    %763 = vmatpush1.msra.mxu0 %v271
    %764 = vmatprep.subr.mxu0 %v276
    %765 = vmatpush1.msra.mxu0 %v275
    %766 = vmatprep.subr.mxu0 %v280
    %767 = vmatpush1.msra.mxu0 %v279
    %768 = vmatprep.subr.mxu0 %v284
    %769 = vmatpush1.msra.mxu0 %v283
    %770 = vmatprep.subr.mxu0 %v288
    %771 = vmatpush1.msra.mxu0 %v287
    %772 = vmatprep.subr.mxu0 %v292
    %773 = vmatpush1.msra.mxu0 %v291
    %774 = vmatprep.subr.mxu0 %v296
    %775 = vmatpush1.msra.mxu0 %v295
    %776 = vmatprep.subr.mxu0 %v300
    %777 = vmatpush1.msra.mxu0 %v299
    %778 = vmatprep.subr.mxu0 %v304
    %779 = vmatpush1.msra.mxu0 %v303
    %780 = vmatprep.subr.mxu0 %v308
    %781 = vmatpush1.msra.mxu0 %v307
    %782 = vmatprep.subr.mxu0 %v312
    %783 = vmatpush1.msra.mxu0 %v311
    %784 = vmatprep.subr.mxu0 %v316
    %785 = vmatpush1.msra.mxu0 %v315
    %786 = vmatprep.subr.mxu0 %v320
    %787 = vmatpush1.msra.mxu0 %v319
    %788 = vmatprep.mubr.f32.mxu0 %v61
    %789 = vmatmul.mubr.f32.gmra.mrb[0].mxu0 %v60
    %v790 = vpop.f32.mrb[0].mxu0
    %v791 = vadd.f32 %v720, %v790
    %v792 = vpop.f32.mrb[0].mxu0
    %v793 = vadd.f32 %v722, %v792
    %794 = vdwg.mxu0
    %795 = vmatprep.subr.mxu0 %v324
    %796 = vmatpush1.msra.mxu0 %v323
    %797 = vmatprep.subr.mxu0 %v328
    %798 = vmatpush1.msra.mxu0 %v327
    %799 = vmatprep.subr.mxu0 %v332
    %800 = vmatpush1.msra.mxu0 %v331
    %801 = vmatprep.subr.mxu0 %v336
    %802 = vmatpush1.msra.mxu0 %v335
    %803 = vmatprep.subr.mxu0 %v340
    %804 = vmatpush1.msra.mxu0 %v339
    %805 = vmatprep.subr.mxu0 %v344
    %806 = vmatpush1.msra.mxu0 %v343
    %807 = vmatprep.subr.mxu0 %v348
    %808 = vmatpush1.msra.mxu0 %v347
    %809 = vmatprep.subr.mxu0 %v352
    %810 = vmatpush1.msra.mxu0 %v351
    %811 = vmatprep.subr.mxu0 %v356
    %812 = vmatpush1.msra.mxu0 %v355
    %813 = vmatprep.subr.mxu0 %v360
    %814 = vmatpush1.msra.mxu0 %v359
    %815 = vmatprep.subr.mxu0 %v364
    %816 = vmatpush1.msra.mxu0 %v363
    %817 = vmatprep.subr.mxu0 %v368
    %818 = vmatpush1.msra.mxu0 %v367
    %819 = vmatprep.subr.mxu0 %v372
    %820 = vmatpush1.msra.mxu0 %v371
    %821 = vmatprep.subr.mxu0 %v376
    %822 = vmatpush1.msra.mxu0 %v375
    %823 = vmatprep.subr.mxu0 %v380
    %824 = vmatpush1.msra.mxu0 %v379
    %825 = vmatprep.subr.mxu0 %v384
    %826 = vmatpush1.msra.mxu0 %v383
    %827 = vmatprep.subr.mxu0 %v388
    %828 = vmatpush1.msra.mxu0 %v387
    %829 = vmatprep.subr.mxu0 %v392
    %830 = vmatpush1.msra.mxu0 %v391
    %831 = vmatprep.subr.mxu0 %v396
    %832 = vmatpush1.msra.mxu0 %v395
    %833 = vmatprep.subr.mxu0 %v400
    %834 = vmatpush1.msra.mxu0 %v399
    %835 = vmatprep.subr.mxu0 %v404
    %836 = vmatpush1.msra.mxu0 %v403
    %837 = vmatprep.subr.mxu0 %v408
    %838 = vmatpush1.msra.mxu0 %v407
    %839 = vmatprep.subr.mxu0 %v412
    %840 = vmatpush1.msra.mxu0 %v411
    %841 = vmatprep.subr.mxu0 %v416
    %842 = vmatpush1.msra.mxu0 %v415
    %843 = vmatprep.subr.mxu0 %v420
    %844 = vmatpush1.msra.mxu0 %v419
    %845 = vmatprep.subr.mxu0 %v424
    %846 = vmatpush1.msra.mxu0 %v423
    %847 = vmatprep.subr.mxu0 %v428
    %848 = vmatpush1.msra.mxu0 %v427
    %849 = vmatprep.subr.mxu0 %v432
    %850 = vmatpush1.msra.mxu0 %v431
    %851 = vmatprep.subr.mxu0 %v436
    %852 = vmatpush1.msra.mxu0 %v435
    %853 = vmatprep.subr.mxu0 %v440
    %854 = vmatpush1.msra.mxu0 %v439
    %855 = vmatprep.subr.mxu0 %v444
    %856 = vmatpush1.msra.mxu0 %v443
    %857 = vmatprep.subr.mxu0 %v448
    %858 = vmatpush1.msra.mxu0 %v447
    %859 = vmatprep.mubr.f32.mxu0 %v63
    %860 = vmatmul.mubr.f32.gmra.mrb[0].mxu0 %v62
    %v861 = vpop.f32.mrb[0].mxu0
    %v862 = vadd.f32 %v791, %v861
    %v863 = vpop.f32.mrb[0].mxu0
    %v864 = vadd.f32 %v793, %v863
    %865 = vdwg.mxu0
    %866 = vmatprep.subr.mxu0 %v452
    %867 = vmatpush1.msra.mxu0 %v451
    %868 = vmatprep.subr.mxu0 %v456
    %869 = vmatpush1.msra.mxu0 %v455
    %870 = vmatprep.subr.mxu0 %v460
    %871 = vmatpush1.msra.mxu0 %v459
    %872 = vmatprep.subr.mxu0 %v464
    %873 = vmatpush1.msra.mxu0 %v463
    %874 = vmatprep.subr.mxu0 %v468
    %875 = vmatpush1.msra.mxu0 %v467
    %876 = vmatprep.subr.mxu0 %v472
    %877 = vmatpush1.msra.mxu0 %v471
    %878 = vmatprep.subr.mxu0 %v476
    %879 = vmatpush1.msra.mxu0 %v475
    %880 = vmatprep.subr.mxu0 %v480
    %881 = vmatpush1.msra.mxu0 %v479
    %882 = vmatprep.subr.mxu0 %v484
    %883 = vmatpush1.msra.mxu0 %v483
    %884 = vmatprep.subr.mxu0 %v488
    %885 = vmatpush1.msra.mxu0 %v487
    %886 = vmatprep.subr.mxu0 %v492
    %887 = vmatpush1.msra.mxu0 %v491
    %888 = vmatprep.subr.mxu0 %v496
    %889 = vmatpush1.msra.mxu0 %v495
    %890 = vmatprep.subr.mxu0 %v500
    %891 = vmatpush1.msra.mxu0 %v499
    %892 = vmatprep.subr.mxu0 %v504
    %893 = vmatpush1.msra.mxu0 %v503
    %894 = vmatprep.subr.mxu0 %v508
    %895 = vmatpush1.msra.mxu0 %v507
    %896 = vmatprep.subr.mxu0 %v512
    %897 = vmatpush1.msra.mxu0 %v511
    %898 = vmatprep.subr.mxu0 %v516
    %899 = vmatpush1.msra.mxu0 %v515
    %900 = vmatprep.subr.mxu0 %v520
    %901 = vmatpush1.msra.mxu0 %v519
    %902 = vmatprep.subr.mxu0 %v524
    %903 = vmatpush1.msra.mxu0 %v523
    %904 = vmatprep.subr.mxu0 %v528
    %905 = vmatpush1.msra.mxu0 %v527
    %906 = vmatprep.subr.mxu0 %v532
    %907 = vmatpush1.msra.mxu0 %v531
    %908 = vmatprep.subr.mxu0 %v536
    %909 = vmatpush1.msra.mxu0 %v535
    %910 = vmatprep.subr.mxu0 %v540
    %911 = vmatpush1.msra.mxu0 %v539
    %912 = vmatprep.subr.mxu0 %v544
    %913 = vmatpush1.msra.mxu0 %v543
    %914 = vmatprep.subr.mxu0 %v548
    %915 = vmatpush1.msra.mxu0 %v547
    %916 = vmatprep.subr.mxu0 %v552
    %917 = vmatpush1.msra.mxu0 %v551
    %918 = vmatprep.subr.mxu0 %v556
    %919 = vmatpush1.msra.mxu0 %v555
    %920 = vmatprep.subr.mxu0 %v560
    %921 = vmatpush1.msra.mxu0 %v559
    %922 = vmatprep.subr.mxu0 %v564
    %923 = vmatpush1.msra.mxu0 %v563
    %924 = vmatprep.subr.mxu0 %v568
    %925 = vmatpush1.msra.mxu0 %v567
    %926 = vmatprep.subr.mxu0 %v572
    %927 = vmatpush1.msra.mxu0 %v571
    %928 = vmatprep.subr.mxu0 %v576
    %929 = vmatpush1.msra.mxu0 %v575
    %930 = vmatprep.mubr.f32.mxu0 %v65
    %931 = vmatmul.mubr.f32.gmra.mrb[0].mxu0 %v64
    %v932 = vpop.f32.mrb[0].mxu0
    %v933 = vadd.f32 %v862, %v932
    %v934 = vpop.f32.mrb[0].mxu0
    %v935 = vadd.f32 %v864, %v934
    %936 = vdwg.mxu0
    %937 = vmatprep.subr.mxu0 %v580
    %938 = vmatpush1.msra.mxu0 %v579
    %939 = vmatprep.subr.mxu0 %v584
    %940 = vmatpush1.msra.mxu0 %v583
    %941 = vmatprep.subr.mxu0 %v588
    %942 = vmatpush1.msra.mxu0 %v587
    %943 = vmatprep.subr.mxu0 %v592
    %944 = vmatpush1.msra.mxu0 %v591
    %945 = vmatprep.subr.mxu0 %v596
    %946 = vmatpush1.msra.mxu0 %v595
    %947 = vmatprep.subr.mxu0 %v600
    %948 = vmatpush1.msra.mxu0 %v599
    %949 = vmatprep.subr.mxu0 %v604
    %950 = vmatpush1.msra.mxu0 %v603
    %951 = vmatprep.subr.mxu0 %v608
    %952 = vmatpush1.msra.mxu0 %v607
    %953 = vmatprep.subr.mxu0 %v612
    %954 = vmatpush1.msra.mxu0 %v611
    %955 = vmatprep.subr.mxu0 %v616
    %956 = vmatpush1.msra.mxu0 %v615
    %957 = vmatprep.subr.mxu0 %v620
    %958 = vmatpush1.msra.mxu0 %v619
    %959 = vmatprep.subr.mxu0 %v624
    %960 = vmatpush1.msra.mxu0 %v623
    %961 = vmatprep.subr.mxu0 0.0
    %962 = vmatpush1.msra.mxu0 0.0
    %963 = vmatprep.subr.mxu0 0.0
    %964 = vmatpush1.msra.mxu0 0.0
    %965 = vmatprep.subr.mxu0 0.0
    %966 = vmatpush1.msra.mxu0 0.0
    %967 = vmatprep.subr.mxu0 0.0
    %968 = vmatpush1.msra.mxu0 0.0
    %969 = vmatprep.subr.mxu0 0.0
    %970 = vmatpush1.msra.mxu0 0.0
    %971 = vmatprep.subr.mxu0 0.0
    %972 = vmatpush1.msra.mxu0 0.0
    %973 = vmatprep.subr.mxu0 0.0
    %974 = vmatpush1.msra.mxu0 0.0
    %975 = vmatprep.subr.mxu0 0.0
    %976 = vmatpush1.msra.mxu0 0.0
    %977 = vmatprep.subr.mxu0 0.0
    %978 = vmatpush1.msra.mxu0 0.0
    %979 = vmatprep.subr.mxu0 0.0
    %980 = vmatpush1.msra.mxu0 0.0
    %981 = vmatprep.subr.mxu0 0.0
    %982 = vmatpush1.msra.mxu0 0.0
    %983 = vmatprep.subr.mxu0 0.0
    %984 = vmatpush1.msra.mxu0 0.0
    %985 = vmatprep.subr.mxu0 0.0
    %986 = vmatpush1.msra.mxu0 0.0
    %987 = vmatprep.subr.mxu0 0.0
    %988 = vmatpush1.msra.mxu0 0.0
    %989 = vmatprep.subr.mxu0 0.0
    %990 = vmatpush1.msra.mxu0 0.0
    %991 = vmatprep.subr.mxu0 0.0
    %992 = vmatpush1.msra.mxu0 0.0
    %993 = vmatprep.subr.mxu0 0.0
    %994 = vmatpush1.msra.mxu0 0.0
    %995 = vmatprep.subr.mxu0 0.0
    %996 = vmatpush1.msra.mxu0 0.0
    %997 = vmatprep.subr.mxu0 0.0
    %998 = vmatpush1.msra.mxu0 0.0
    %999 = vmatprep.subr.mxu0 0.0
    %1000 = vmatpush1.msra.mxu0 0.0
    %1001 = vmatprep.mubr.f32.mxu0 0.0
    %1002 = vmatmul.mubr.f32.gmra.mrb[0].mxu0 %v651
    %v1003 = vpop.f32.mrb[0].mxu0
    %v1004 = vadd.f32 %v933, %v1003
    %v1005 = vpop.f32.mrb[0].mxu0
    %v1006 = vadd.f32 %v935, %v1005
    %1007 = vdwg.mxu0
    %1008 = vmatprep.subr.mxu0 %v70
    %1009 = vmatpush1.msra.mxu0 %v69
    %1010 = vmatprep.subr.mxu0 %v74
    %1011 = vmatpush1.msra.mxu0 %v73
    %1012 = vmatprep.subr.mxu0 %v78
    %1013 = vmatpush1.msra.mxu0 %v77
    %1014 = vmatprep.subr.mxu0 %v82
    %1015 = vmatpush1.msra.mxu0 %v81
    %1016 = vmatprep.subr.mxu0 %v86
    %1017 = vmatpush1.msra.mxu0 %v85
    %1018 = vmatprep.subr.mxu0 %v90
    %1019 = vmatpush1.msra.mxu0 %v89
    %1020 = vmatprep.subr.mxu0 %v94
    %1021 = vmatpush1.msra.mxu0 %v93
    %1022 = vmatprep.subr.mxu0 %v98
    %1023 = vmatpush1.msra.mxu0 %v97
    %1024 = vmatprep.subr.mxu0 %v102
    %1025 = vmatpush1.msra.mxu0 %v101
    %1026 = vmatprep.subr.mxu0 %v106
    %1027 = vmatpush1.msra.mxu0 %v105
    %1028 = vmatprep.subr.mxu0 %v110
    %1029 = vmatpush1.msra.mxu0 %v109
    %1030 = vmatprep.subr.mxu0 %v114
    %1031 = vmatpush1.msra.mxu0 %v113
    %1032 = vmatprep.subr.mxu0 %v118
    %1033 = vmatpush1.msra.mxu0 %v117
    %1034 = vmatprep.subr.mxu0 %v122
    %1035 = vmatpush1.msra.mxu0 %v121
    %1036 = vmatprep.subr.mxu0 %v126
    %1037 = vmatpush1.msra.mxu0 %v125
    %1038 = vmatprep.subr.mxu0 %v130
    %1039 = vmatpush1.msra.mxu0 %v129
    %1040 = vmatprep.subr.mxu0 %v134
    %1041 = vmatpush1.msra.mxu0 %v133
    %1042 = vmatprep.subr.mxu0 %v138
    %1043 = vmatpush1.msra.mxu0 %v137
    %1044 = vmatprep.subr.mxu0 %v142
    %1045 = vmatpush1.msra.mxu0 %v141
    %1046 = vmatprep.subr.mxu0 %v146
    %1047 = vmatpush1.msra.mxu0 %v145
    %1048 = vmatprep.subr.mxu0 %v150
    %1049 = vmatpush1.msra.mxu0 %v149
    %1050 = vmatprep.subr.mxu0 %v154
    %1051 = vmatpush1.msra.mxu0 %v153
    %1052 = vmatprep.subr.mxu0 %v158
    %1053 = vmatpush1.msra.mxu0 %v157
    %1054 = vmatprep.subr.mxu0 %v162
    %1055 = vmatpush1.msra.mxu0 %v161
    %1056 = vmatprep.subr.mxu0 %v166
    %1057 = vmatpush1.msra.mxu0 %v165
    %1058 = vmatprep.subr.mxu0 %v170
    %1059 = vmatpush1.msra.mxu0 %v169
    %1060 = vmatprep.subr.mxu0 %v174
    %1061 = vmatpush1.msra.mxu0 %v173
    %1062 = vmatprep.subr.mxu0 %v178
    %1063 = vmatpush1.msra.mxu0 %v177
    %1064 = vmatprep.subr.mxu0 %v182
    %1065 = vmatpush1.msra.mxu0 %v181
    %1066 = vmatprep.subr.mxu0 %v186
    %1067 = vmatpush1.msra.mxu0 %v185
    %1068 = vmatprep.subr.mxu0 %v190
    %1069 = vmatpush1.msra.mxu0 %v189
    %1070 = vmatprep.subr.mxu0 %v194
    %1071 = vmatpush1.msra.mxu0 %v193
    %1072 = vmatprep.mubr.f32.mxu0 %v59
    %1073 = vmatmul.mubr.f32.gmra.mrb[0].mxu0 %v58
    %v1074 = vpop.f32.mrb[0].mxu0
    %v1075 = vadd.f32 %v640, %v1074
    %v1076 = vpop.f32.mrb[0].mxu0
    %v1077 = vadd.f32 %v644, %v1076
    %1078 = vdwg.mxu0
    %1079 = vmatprep.subr.mxu0 %v198
    %1080 = vmatpush1.msra.mxu0 %v197
    %1081 = vmatprep.subr.mxu0 %v202
    %1082 = vmatpush1.msra.mxu0 %v201
    %1083 = vmatprep.subr.mxu0 %v206
    %1084 = vmatpush1.msra.mxu0 %v205
    %1085 = vmatprep.subr.mxu0 %v210
    %1086 = vmatpush1.msra.mxu0 %v209
    %1087 = vmatprep.subr.mxu0 %v214
    %1088 = vmatpush1.msra.mxu0 %v213
    %1089 = vmatprep.subr.mxu0 %v218
    %1090 = vmatpush1.msra.mxu0 %v217
    %1091 = vmatprep.subr.mxu0 %v222
    %1092 = vmatpush1.msra.mxu0 %v221
    %1093 = vmatprep.subr.mxu0 %v226
    %1094 = vmatpush1.msra.mxu0 %v225
    %1095 = vmatprep.subr.mxu0 %v230
    %1096 = vmatpush1.msra.mxu0 %v229
    %1097 = vmatprep.subr.mxu0 %v234
    %1098 = vmatpush1.msra.mxu0 %v233
    %1099 = vmatprep.subr.mxu0 %v238
    %1100 = vmatpush1.msra.mxu0 %v237
    %1101 = vmatprep.subr.mxu0 %v242
    %1102 = vmatpush1.msra.mxu0 %v241
    %1103 = vmatprep.subr.mxu0 %v246
    %1104 = vmatpush1.msra.mxu0 %v245
    %1105 = vmatprep.subr.mxu0 %v250
    %1106 = vmatpush1.msra.mxu0 %v249
    %1107 = vmatprep.subr.mxu0 %v254
    %1108 = vmatpush1.msra.mxu0 %v253
    %1109 = vmatprep.subr.mxu0 %v258
    %1110 = vmatpush1.msra.mxu0 %v257
    %1111 = vmatprep.subr.mxu0 %v262
    %1112 = vmatpush1.msra.mxu0 %v261
    %1113 = vmatprep.subr.mxu0 %v266
    %1114 = vmatpush1.msra.mxu0 %v265
    %1115 = vmatprep.subr.mxu0 %v270
    %1116 = vmatpush1.msra.mxu0 %v269
    %1117 = vmatprep.subr.mxu0 %v274
    %1118 = vmatpush1.msra.mxu0 %v273
    %1119 = vmatprep.subr.mxu0 %v278
    %1120 = vmatpush1.msra.mxu0 %v277
    %1121 = vmatprep.subr.mxu0 %v282
    %1122 = vmatpush1.msra.mxu0 %v281
    %1123 = vmatprep.subr.mxu0 %v286
    %1124 = vmatpush1.msra.mxu0 %v285
    %1125 = vmatprep.subr.mxu0 %v290
    %1126 = vmatpush1.msra.mxu0 %v289
    %1127 = vmatprep.subr.mxu0 %v294
    %1128 = vmatpush1.msra.mxu0 %v293
    %1129 = vmatprep.subr.mxu0 %v298
    %1130 = vmatpush1.msra.mxu0 %v297
    %1131 = vmatprep.subr.mxu0 %v302
    %1132 = vmatpush1.msra.mxu0 %v301
    %1133 = vmatprep.subr.mxu0 %v306
    %1134 = vmatpush1.msra.mxu0 %v305
    %1135 = vmatprep.subr.mxu0 %v310
    %1136 = vmatpush1.msra.mxu0 %v309
    %1137 = vmatprep.subr.mxu0 %v314
    %1138 = vmatpush1.msra.mxu0 %v313
    %1139 = vmatprep.subr.mxu0 %v318
    %1140 = vmatpush1.msra.mxu0 %v317
    %1141 = vmatprep.subr.mxu0 %v322
    %1142 = vmatpush1.msra.mxu0 %v321
    %1143 = vmatprep.mubr.f32.mxu0 %v61
    %1144 = vmatmul.mubr.f32.gmra.mrb[0].mxu0 %v60
    %v1145 = vpop.f32.mrb[0].mxu0
    %v1146 = vadd.f32 %v1075, %v1145
    %v1147 = vpop.f32.mrb[0].mxu0
    %v1148 = vadd.f32 %v1077, %v1147
    %1149 = vdwg.mxu0
    %1150 = vmatprep.subr.mxu0 %v326
    %1151 = vmatpush1.msra.mxu0 %v325
    %1152 = vmatprep.subr.mxu0 %v330
    %1153 = vmatpush1.msra.mxu0 %v329
    %1154 = vmatprep.subr.mxu0 %v334
    %1155 = vmatpush1.msra.mxu0 %v333
    %1156 = vmatprep.subr.mxu0 %v338
    %1157 = vmatpush1.msra.mxu0 %v337
    %1158 = vmatprep.subr.mxu0 %v342
    %1159 = vmatpush1.msra.mxu0 %v341
    %1160 = vmatprep.subr.mxu0 %v346
    %1161 = vmatpush1.msra.mxu0 %v345
    %1162 = vmatprep.subr.mxu0 %v350
    %1163 = vmatpush1.msra.mxu0 %v349
    %1164 = vmatprep.subr.mxu0 %v354
    %1165 = vmatpush1.msra.mxu0 %v353
    %1166 = vmatprep.subr.mxu0 %v358
    %1167 = vmatpush1.msra.mxu0 %v357
    %1168 = vmatprep.subr.mxu0 %v362
    %1169 = vmatpush1.msra.mxu0 %v361
    %1170 = vmatprep.subr.mxu0 %v366
    %1171 = vmatpush1.msra.mxu0 %v365
    %1172 = vmatprep.subr.mxu0 %v370
    %1173 = vmatpush1.msra.mxu0 %v369
    %1174 = vmatprep.subr.mxu0 %v374
    %1175 = vmatpush1.msra.mxu0 %v373
    %1176 = vmatprep.subr.mxu0 %v378
    %1177 = vmatpush1.msra.mxu0 %v377
    %1178 = vmatprep.subr.mxu0 %v382
    %1179 = vmatpush1.msra.mxu0 %v381
    %1180 = vmatprep.subr.mxu0 %v386
    %1181 = vmatpush1.msra.mxu0 %v385
    %1182 = vmatprep.subr.mxu0 %v390
    %1183 = vmatpush1.msra.mxu0 %v389
    %1184 = vmatprep.subr.mxu0 %v394
    %1185 = vmatpush1.msra.mxu0 %v393
    %1186 = vmatprep.subr.mxu0 %v398
    %1187 = vmatpush1.msra.mxu0 %v397
    %1188 = vmatprep.subr.mxu0 %v402
    %1189 = vmatpush1.msra.mxu0 %v401
    %1190 = vmatprep.subr.mxu0 %v406
    %1191 = vmatpush1.msra.mxu0 %v405
    %1192 = vmatprep.subr.mxu0 %v410
    %1193 = vmatpush1.msra.mxu0 %v409
    %1194 = vmatprep.subr.mxu0 %v414
    %1195 = vmatpush1.msra.mxu0 %v413
    %1196 = vmatprep.subr.mxu0 %v418
    %1197 = vmatpush1.msra.mxu0 %v417
    %1198 = vmatprep.subr.mxu0 %v422
    %1199 = vmatpush1.msra.mxu0 %v421
    %1200 = vmatprep.subr.mxu0 %v426
    %1201 = vmatpush1.msra.mxu0 %v425
    %1202 = vmatprep.subr.mxu0 %v430
    %1203 = vmatpush1.msra.mxu0 %v429
    %1204 = vmatprep.subr.mxu0 %v434
    %1205 = vmatpush1.msra.mxu0 %v433
    %1206 = vmatprep.subr.mxu0 %v438
    %1207 = vmatpush1.msra.mxu0 %v437
    %1208 = vmatprep.subr.mxu0 %v442
    %1209 = vmatpush1.msra.mxu0 %v441
    %1210 = vmatprep.subr.mxu0 %v446
    %1211 = vmatpush1.msra.mxu0 %v445
    %1212 = vmatprep.subr.mxu0 %v450
    %1213 = vmatpush1.msra.mxu0 %v449
    %1214 = vmatprep.mubr.f32.mxu0 %v63
    %1215 = vmatmul.mubr.f32.gmra.mrb[0].mxu0 %v62
    %v1216 = vpop.f32.mrb[0].mxu0
    %v1217 = vadd.f32 %v1146, %v1216
    %v1218 = vpop.f32.mrb[0].mxu0
    %v1219 = vadd.f32 %v1148, %v1218
    %1220 = vdwg.mxu0
    %1221 = vmatprep.subr.mxu0 %v454
    %1222 = vmatpush1.msra.mxu0 %v453
    %1223 = vmatprep.subr.mxu0 %v458
    %1224 = vmatpush1.msra.mxu0 %v457
    %1225 = vmatprep.subr.mxu0 %v462
    %1226 = vmatpush1.msra.mxu0 %v461
    %1227 = vmatprep.subr.mxu0 %v466
    %1228 = vmatpush1.msra.mxu0 %v465
    %1229 = vmatprep.subr.mxu0 %v470
    %1230 = vmatpush1.msra.mxu0 %v469
    %1231 = vmatprep.subr.mxu0 %v474
    %1232 = vmatpush1.msra.mxu0 %v473
    %1233 = vmatprep.subr.mxu0 %v478
    %1234 = vmatpush1.msra.mxu0 %v477
    %1235 = vmatprep.subr.mxu0 %v482
    %1236 = vmatpush1.msra.mxu0 %v481
    %1237 = vmatprep.subr.mxu0 %v486
    %1238 = vmatpush1.msra.mxu0 %v485
    %1239 = vmatprep.subr.mxu0 %v490
    %1240 = vmatpush1.msra.mxu0 %v489
    %1241 = vmatprep.subr.mxu0 %v494
    %1242 = vmatpush1.msra.mxu0 %v493
    %1243 = vmatprep.subr.mxu0 %v498
    %1244 = vmatpush1.msra.mxu0 %v497
    %1245 = vmatprep.subr.mxu0 %v502
    %1246 = vmatpush1.msra.mxu0 %v501
    %1247 = vmatprep.subr.mxu0 %v506
    %1248 = vmatpush1.msra.mxu0 %v505
    %1249 = vmatprep.subr.mxu0 %v510
    %1250 = vmatpush1.msra.mxu0 %v509
    %1251 = vmatprep.subr.mxu0 %v514
    %1252 = vmatpush1.msra.mxu0 %v513
    %1253 = vmatprep.subr.mxu0 %v518
    %1254 = vmatpush1.msra.mxu0 %v517
    %1255 = vmatprep.subr.mxu0 %v522
    %1256 = vmatpush1.msra.mxu0 %v521
    %1257 = vmatprep.subr.mxu0 %v526
    %1258 = vmatpush1.msra.mxu0 %v525
    %1259 = vmatprep.subr.mxu0 %v530
    %1260 = vmatpush1.msra.mxu0 %v529
    %1261 = vmatprep.subr.mxu0 %v534
    %1262 = vmatpush1.msra.mxu0 %v533
    %1263 = vmatprep.subr.mxu0 %v538
    %1264 = vmatpush1.msra.mxu0 %v537
    %1265 = vmatprep.subr.mxu0 %v542
    %1266 = vmatpush1.msra.mxu0 %v541
    %1267 = vmatprep.subr.mxu0 %v546
    %1268 = vmatpush1.msra.mxu0 %v545
    %1269 = vmatprep.subr.mxu0 %v550
    %1270 = vmatpush1.msra.mxu0 %v549
    %1271 = vmatprep.subr.mxu0 %v554
    %1272 = vmatpush1.msra.mxu0 %v553
    %1273 = vmatprep.subr.mxu0 %v558
    %1274 = vmatpush1.msra.mxu0 %v557
    %1275 = vmatprep.subr.mxu0 %v562
    %1276 = vmatpush1.msra.mxu0 %v561
    %1277 = vmatprep.subr.mxu0 %v566
    %1278 = vmatpush1.msra.mxu0 %v565
    %1279 = vmatprep.subr.mxu0 %v570
    %1280 = vmatpush1.msra.mxu0 %v569
    %1281 = vmatprep.subr.mxu0 %v574
    %1282 = vmatpush1.msra.mxu0 %v573
    %1283 = vmatprep.subr.mxu0 %v578
    %1284 = vmatpush1.msra.mxu0 %v577
    %1285 = vmatprep.mubr.f32.mxu0 %v65
    %1286 = vmatmul.mubr.f32.gmra.mrb[0].mxu0 %v64
    %v1287 = vpop.f32.mrb[0].mxu0
    %v1288 = vadd.f32 %v1217, %v1287
    %v1289 = vpop.f32.mrb[0].mxu0
    %v1290 = vadd.f32 %v1219, %v1289
    %1291 = vdwg.mxu0
    %1292 = vmatprep.subr.mxu0 %v582
    %1293 = vmatpush1.msra.mxu0 %v581
    %1294 = vmatprep.subr.mxu0 %v586
    %1295 = vmatpush1.msra.mxu0 %v585
    %1296 = vmatprep.subr.mxu0 %v590
    %1297 = vmatpush1.msra.mxu0 %v589
    %1298 = vmatprep.subr.mxu0 %v594
    %1299 = vmatpush1.msra.mxu0 %v593
    %1300 = vmatprep.subr.mxu0 %v598
    %1301 = vmatpush1.msra.mxu0 %v597
    %1302 = vmatprep.subr.mxu0 %v602
    %1303 = vmatpush1.msra.mxu0 %v601
    %1304 = vmatprep.subr.mxu0 %v606
    %1305 = vmatpush1.msra.mxu0 %v605
    %1306 = vmatprep.subr.mxu0 %v610
    %1307 = vmatpush1.msra.mxu0 %v609
    %1308 = vmatprep.subr.mxu0 %v614
    %1309 = vmatpush1.msra.mxu0 %v613
    %1310 = vmatprep.subr.mxu0 %v618
    %1311 = vmatpush1.msra.mxu0 %v617
    %1312 = vmatprep.subr.mxu0 %v622
    %1313 = vmatpush1.msra.mxu0 %v621
    %1314 = vmatprep.subr.mxu0 %v626
    %1315 = vmatpush1.msra.mxu0 %v625
    %1316 = vmatprep.subr.mxu0 0.0
    %1317 = vmatpush1.msra.mxu0 0.0
    %1318 = vmatprep.subr.mxu0 0.0
    %1319 = vmatpush1.msra.mxu0 0.0
    %1320 = vmatprep.subr.mxu0 0.0
    %1321 = vmatpush1.msra.mxu0 0.0
    %1322 = vmatprep.subr.mxu0 0.0
    %1323 = vmatpush1.msra.mxu0 0.0
    %1324 = vmatprep.subr.mxu0 0.0
    %1325 = vmatpush1.msra.mxu0 0.0
    %1326 = vmatprep.subr.mxu0 0.0
    %1327 = vmatpush1.msra.mxu0 0.0
    %1328 = vmatprep.subr.mxu0 0.0
    %1329 = vmatpush1.msra.mxu0 0.0
    %1330 = vmatprep.subr.mxu0 0.0
    %1331 = vmatpush1.msra.mxu0 0.0
    %1332 = vmatprep.subr.mxu0 0.0
    %1333 = vmatpush1.msra.mxu0 0.0
    %1334 = vmatprep.subr.mxu0 0.0
    %1335 = vmatpush1.msra.mxu0 0.0
    %1336 = vmatprep.subr.mxu0 0.0
    %1337 = vmatpush1.msra.mxu0 0.0
    %1338 = vmatprep.subr.mxu0 0.0
    %1339 = vmatpush1.msra.mxu0 0.0
    %1340 = vmatprep.subr.mxu0 0.0
    %1341 = vmatpush1.msra.mxu0 0.0
    %1342 = vmatprep.subr.mxu0 0.0
    %1343 = vmatpush1.msra.mxu0 0.0
    %1344 = vmatprep.subr.mxu0 0.0
    %1345 = vmatpush1.msra.mxu0 0.0
    %1346 = vmatprep.subr.mxu0 0.0
    %1347 = vmatpush1.msra.mxu0 0.0
    %1348 = vmatprep.subr.mxu0 0.0
    %1349 = vmatpush1.msra.mxu0 0.0
    %1350 = vmatprep.subr.mxu0 0.0
    %1351 = vmatpush1.msra.mxu0 0.0
    %1352 = vmatprep.subr.mxu0 0.0
    %1353 = vmatpush1.msra.mxu0 0.0
    %1354 = vmatprep.subr.mxu0 0.0
    %1355 = vmatpush1.msra.mxu0 0.0
    %1356 = vmatprep.mubr.f32.mxu0 0.0
    %1357 = vmatmul.mubr.f32.gmra.mrb[0].mxu0 %v651
    %v1358 = vpop.f32.mrb[0].mxu0
    %v1359 = vadd.f32 %v1288, %v1358
    %v1360 = vpop.f32.mrb[0].mxu0
    %v1361 = vadd.f32 %v1290, %v1360
    %1362 = vdwg.mxu0
    %v1363 = vmax.f32 %v1004, 0.0
    %v1364 = vmax.f32 %v1006, 0.0
    %v1365 = vmax.f32 %v1359, 0.0
    %v1366 = vmax.f32 %v1361, 0.0
    %v1367 = vld [vmem:[%s3] sm:$0xff]
    %v1368 = vld [vmem:[%s3 + $0x8] sm:$0xff]
    %v1369 = vld [vmem:[%s3 + $0x10] sm:$0xff]
    %v1370 = vld [vmem:[%s3 + $0x18] sm:$0xff]
    %v1371 = vld [vmem:[%s3 + $0x20] sm:$0xff]
    %v1372 = vld [vmem:[%s3 + $0x28] sm:$0xff]
    %v1373 = vld [vmem:[%s3 + $0x30] sm:$0xff]
    %v1374 = vld [vmem:[%s3 + $0x38] sm:$0xff]
    %v1375 = vld [vmem:[%s3 + $0x40] sm:$0xff]
    %v1376 = vld [vmem:[%s3 + $0x48] sm:$0xff]
    %v1377 = vld [vmem:[%s3 + $0x50] sm:$0xff]
    %v1378 = vld [vmem:[%s3 + $0x58] sm:$0xff]
    %v1379 = vld [vmem:[%s3 + $0x60] sm:$0xff]
    %v1380 = vld [vmem:[%s3 + $0x68] sm:$0xff]
    %v1381 = vld [vmem:[%s3 + $0x70] sm:$0xff]
    %v1382 = vld [vmem:[%s3 + $0x78] sm:$0xff]
    %v1383 = vld [vmem:[%s3 + $0x80] sm:$0xff]
    %v1384 = vld [vmem:[%s3 + $0x88] sm:$0xff]
    %v1385 = vld [vmem:[%s3 + $0x90] sm:$0xff]
    %v1386 = vld [vmem:[%s3 + $0x98] sm:$0xff]
    %v1387 = vld [vmem:[%s3 + $0xa0] sm:$0xff]
    %v1388 = vld [vmem:[%s3 + $0xa8] sm:$0xff]
    %v1389 = vld [vmem:[%s3 + $0xb0] sm:$0xff]
    %v1390 = vld [vmem:[%s3 + $0xb8] sm:$0xff]
    %v1391 = vld [vmem:[%s3 + $0xc0] sm:$0xff]
    %v1392 = vld [vmem:[%s3 + $0xc8] sm:$0xff]
    %v1393 = vld [vmem:[%s3 + $0xd0] sm:$0xff]
    %v1394 = vld [vmem:[%s3 + $0xd8] sm:$0xff]
    %v1395 = vld [vmem:[%s3 + $0xe0] sm:$0xff]
    %v1396 = vld [vmem:[%s3 + $0xe8] sm:$0xff]
    %v1397 = vld [vmem:[%s3 + $0xf0] sm:$0xff]
    %v1398 = vld [vmem:[%s3 + $0xf8] sm:$0xff]
    %v1399 = vld [vmem:[%s3 + $0x100] sm:$0xff]
    %v1400 = vld [vmem:[%s3 + $0x108] sm:$0xff]
    %v1401 = vld [vmem:[%s3 + $0x110] sm:$0xff]
    %v1402 = vld [vmem:[%s3 + $0x118] sm:$0xff]
    %v1403 = vld [vmem:[%s3 + $0x120] sm:$0xff]
    %v1404 = vld [vmem:[%s3 + $0x128] sm:$0xff]
    %v1405 = vld [vmem:[%s3 + $0x130] sm:$0xff]
    %v1406 = vld [vmem:[%s3 + $0x138] sm:$0xff]
    %v1407 = vld [vmem:[%s3 + $0x140] sm:$0xff]
    %v1408 = vld [vmem:[%s3 + $0x148] sm:$0xff]
    %v1409 = vld [vmem:[%s3 + $0x150] sm:$0xff]
    %v1410 = vld [vmem:[%s3 + $0x158] sm:$0xff]
    %v1411 = vld [vmem:[%s3 + $0x160] sm:$0xff]
    %v1412 = vld [vmem:[%s3 + $0x168] sm:$0xff]
    %v1413 = vld [vmem:[%s3 + $0x170] sm:$0xff]
    %v1414 = vld [vmem:[%s3 + $0x178] sm:$0xff]
    %v1415 = vld [vmem:[%s3 + $0x180] sm:$0xff]
    %v1416 = vld [vmem:[%s3 + $0x188] sm:$0xff]
    %v1417 = vld [vmem:[%s3 + $0x190] sm:$0xff]
    %v1418 = vld [vmem:[%s3 + $0x198] sm:$0xff]
    %v1419 = vld [vmem:[%s3 + $0x1a0] sm:$0xff]
    %v1420 = vld [vmem:[%s3 + $0x1a8] sm:$0xff]
    %v1421 = vld [vmem:[%s3 + $0x1b0] sm:$0xff]
    %v1422 = vld [vmem:[%s3 + $0x1b8] sm:$0xff]
    %v1423 = vld [vmem:[%s3 + $0x1c0] sm:$0xff]
    %v1424 = vld [vmem:[%s3 + $0x1c8] sm:$0xff]
    %v1425 = vld [vmem:[%s3 + $0x1d0] sm:$0xff]
    %v1426 = vld [vmem:[%s3 + $0x1d8] sm:$0xff]
    %v1427 = vld [vmem:[%s3 + $0x1e0] sm:$0xff]
    %v1428 = vld [vmem:[%s3 + $0x1e8] sm:$0xff]
    %v1429 = vld [vmem:[%s3 + $0x1f0] sm:$0xff]
    %v1430 = vld [vmem:[%s3 + $0x1f8] sm:$0xff]
    %v1431 = vld [vmem:[%s4] sm:$0x1]
    %v1433 = vlaneseq
    %v1434 = vshrl.u32 %v1433, 7
    %v1435 = vsub.s32 0, %v1434
    %v1436 = vrot.slane %v1431, %v1435
    %1438 = vmatprep.subr.mxu0 0.0
    %1439 = vmatpush1.msra.mxu0 %v1367
    %1440 = vmatprep.subr.mxu0 0.0
    %1441 = vmatpush1.msra.mxu0 %v1368
    %1442 = vmatprep.subr.mxu0 0.0
    %1443 = vmatpush1.msra.mxu0 %v1369
    %1444 = vmatprep.subr.mxu0 0.0
    %1445 = vmatpush1.msra.mxu0 %v1370
    %1446 = vmatprep.subr.mxu0 0.0
    %1447 = vmatpush1.msra.mxu0 %v1371
    %1448 = vmatprep.subr.mxu0 0.0
    %1449 = vmatpush1.msra.mxu0 %v1372
    %1450 = vmatprep.subr.mxu0 0.0
    %1451 = vmatpush1.msra.mxu0 %v1373
    %1452 = vmatprep.subr.mxu0 0.0
    %1453 = vmatpush1.msra.mxu0 %v1374
    %1454 = vmatprep.subr.mxu0 0.0
    %1455 = vmatpush1.msra.mxu0 %v1375
    %1456 = vmatprep.subr.mxu0 0.0
    %1457 = vmatpush1.msra.mxu0 %v1376
    %1458 = vmatprep.subr.mxu0 0.0
    %1459 = vmatpush1.msra.mxu0 %v1377
    %1460 = vmatprep.subr.mxu0 0.0
    %1461 = vmatpush1.msra.mxu0 %v1378
    %1462 = vmatprep.subr.mxu0 0.0
    %1463 = vmatpush1.msra.mxu0 %v1379
    %1464 = vmatprep.subr.mxu0 0.0
    %1465 = vmatpush1.msra.mxu0 %v1380
    %1466 = vmatprep.subr.mxu0 0.0
    %1467 = vmatpush1.msra.mxu0 %v1381
    %1468 = vmatprep.subr.mxu0 0.0
    %1469 = vmatpush1.msra.mxu0 %v1382
    %1470 = vmatprep.subr.mxu0 0.0
    %1471 = vmatpush1.msra.mxu0 %v1383
    %1472 = vmatprep.subr.mxu0 0.0
    %1473 = vmatpush1.msra.mxu0 %v1384
    %1474 = vmatprep.subr.mxu0 0.0
    %1475 = vmatpush1.msra.mxu0 %v1385
    %1476 = vmatprep.subr.mxu0 0.0
    %1477 = vmatpush1.msra.mxu0 %v1386
    %1478 = vmatprep.subr.mxu0 0.0
    %1479 = vmatpush1.msra.mxu0 %v1387
    %1480 = vmatprep.subr.mxu0 0.0
    %1481 = vmatpush1.msra.mxu0 %v1388
    %1482 = vmatprep.subr.mxu0 0.0
    %1483 = vmatpush1.msra.mxu0 %v1389
    %1484 = vmatprep.subr.mxu0 0.0
    %1485 = vmatpush1.msra.mxu0 %v1390
    %1486 = vmatprep.subr.mxu0 0.0
    %1487 = vmatpush1.msra.mxu0 %v1391
    %1488 = vmatprep.subr.mxu0 0.0
    %1489 = vmatpush1.msra.mxu0 %v1392
    %1490 = vmatprep.subr.mxu0 0.0
    %1491 = vmatpush1.msra.mxu0 %v1393
    %1492 = vmatprep.subr.mxu0 0.0
    %1493 = vmatpush1.msra.mxu0 %v1394
    %1494 = vmatprep.subr.mxu0 0.0
    %1495 = vmatpush1.msra.mxu0 %v1395
    %1496 = vmatprep.subr.mxu0 0.0
    %1497 = vmatpush1.msra.mxu0 %v1396
    %1498 = vmatprep.subr.mxu0 0.0
    %1499 = vmatpush1.msra.mxu0 %v1397
    %1500 = vmatprep.subr.mxu0 0.0
    %1501 = vmatpush1.msra.mxu0 %v1398
    %1502 = vmatprep.mubr.f32.mxu0 %v1364
    %1503 = vmatmul.mubr.f32.gmra.mrb[0].mxu0 %v1363
    %v1504 = vpop.f32.mrb[0].mxu0
    %v1505 = vadd.f32 %v1436, %v1504
    %v1506 = vpop.f32.mrb[0].mxu0
    %1507 = vdwg.mxu0
    %1508 = vmatprep.subr.mxu0 0.0
    %1509 = vmatpush1.msra.mxu0 %v1399
    %1510 = vmatprep.subr.mxu0 0.0
    %1511 = vmatpush1.msra.mxu0 %v1400
    %1512 = vmatprep.subr.mxu0 0.0
    %1513 = vmatpush1.msra.mxu0 %v1401
    %1514 = vmatprep.subr.mxu0 0.0
    %1515 = vmatpush1.msra.mxu0 %v1402
    %1516 = vmatprep.subr.mxu0 0.0
    %1517 = vmatpush1.msra.mxu0 %v1403
    %1518 = vmatprep.subr.mxu0 0.0
    %1519 = vmatpush1.msra.mxu0 %v1404
    %1520 = vmatprep.subr.mxu0 0.0
    %1521 = vmatpush1.msra.mxu0 %v1405
    %1522 = vmatprep.subr.mxu0 0.0
    %1523 = vmatpush1.msra.mxu0 %v1406
    %1524 = vmatprep.subr.mxu0 0.0
    %1525 = vmatpush1.msra.mxu0 %v1407
    %1526 = vmatprep.subr.mxu0 0.0
    %1527 = vmatpush1.msra.mxu0 %v1408
    %1528 = vmatprep.subr.mxu0 0.0
    %1529 = vmatpush1.msra.mxu0 %v1409
    %1530 = vmatprep.subr.mxu0 0.0
    %1531 = vmatpush1.msra.mxu0 %v1410
    %1532 = vmatprep.subr.mxu0 0.0
    %1533 = vmatpush1.msra.mxu0 %v1411
    %1534 = vmatprep.subr.mxu0 0.0
    %1535 = vmatpush1.msra.mxu0 %v1412
    %1536 = vmatprep.subr.mxu0 0.0
    %1537 = vmatpush1.msra.mxu0 %v1413
    %1538 = vmatprep.subr.mxu0 0.0
    %1539 = vmatpush1.msra.mxu0 %v1414
    %1540 = vmatprep.subr.mxu0 0.0
    %1541 = vmatpush1.msra.mxu0 %v1415
    %1542 = vmatprep.subr.mxu0 0.0
    %1543 = vmatpush1.msra.mxu0 %v1416
    %1544 = vmatprep.subr.mxu0 0.0
    %1545 = vmatpush1.msra.mxu0 %v1417
    %1546 = vmatprep.subr.mxu0 0.0
    %1547 = vmatpush1.msra.mxu0 %v1418
    %1548 = vmatprep.subr.mxu0 0.0
    %1549 = vmatpush1.msra.mxu0 %v1419
    %1550 = vmatprep.subr.mxu0 0.0
    %1551 = vmatpush1.msra.mxu0 %v1420
    %1552 = vmatprep.subr.mxu0 0.0
    %1553 = vmatpush1.msra.mxu0 %v1421
    %1554 = vmatprep.subr.mxu0 0.0
    %1555 = vmatpush1.msra.mxu0 %v1422
    %1556 = vmatprep.subr.mxu0 0.0
    %1557 = vmatpush1.msra.mxu0 %v1423
    %1558 = vmatprep.subr.mxu0 0.0
    %1559 = vmatpush1.msra.mxu0 %v1424
    %1560 = vmatprep.subr.mxu0 0.0
    %1561 = vmatpush1.msra.mxu0 %v1425
    %1562 = vmatprep.subr.mxu0 0.0
    %1563 = vmatpush1.msra.mxu0 %v1426
    %1564 = vmatprep.subr.mxu0 0.0
    %1565 = vmatpush1.msra.mxu0 %v1427
    %1566 = vmatprep.subr.mxu0 0.0
    %1567 = vmatpush1.msra.mxu0 %v1428
    %1568 = vmatprep.subr.mxu0 0.0
    %1569 = vmatpush1.msra.mxu0 %v1429
    %1570 = vmatprep.subr.mxu0 0.0
    %1571 = vmatpush1.msra.mxu0 %v1430
    %1572 = vmatprep.mubr.f32.mxu0 %v1366
    %1573 = vmatmul.mubr.f32.gmra.mrb[0].mxu0 %v1365
    %v1574 = vpop.f32.mrb[0].mxu0
    %v1575 = vadd.f32 %v1505, %v1574
    %v1576 = vpop.f32.mrb[0].mxu0
    %1577 = vdwg.mxu0
    %1578 = vst [vmem:[#allocation8] sm:$0xff] %v1575
    // Predicated region
    $region34: #{relation_pred_forward.1} parent=1 // pred_check
      _
    $region35: #{relation_pred_forward.1} parent=1 // pred_check_branch
      %1580 = sbr.rel (0) target = $region37
    $region36: #{relation_pred_forward.1} parent=1 // pred_region
      %s1582 = ssub.s32 128, 128
      %1583 = vsyncadd [#allocation4], %s1582
      %s1585 = sshll.u32 [#allocation8], 4
      %s1586 = int_to_ptr.vmem [resolvable:$true] %s1585
      %1588 = dma.vmem_to_hbm [thread:$0]  %s1586, 128, %s5, [#allocation4]
    $region37: #{relation_pred_forward.1} parent=1 // pred_fallthru
      _
    // Predicated region
    $region38: #{relation_pred_forward.1} parent=1 // pred_check
      _
    $region39: #{relation_pred_forward.1} parent=1 // pred_check_branch
      %1590 = sbr.rel (0) target = $region41
    $region40: #{relation_pred_forward.1} parent=1 // pred_region
      %1591 = dma.done [#allocation4], 128
    $region41: #{relation_pred_forward.1} parent=1 // pred_fallthru
      _
    %1592 = vsyncpa [#allocation3], 1
    %1593 = vsyncpa [#allocation6], 1
    %1594 = vsyncpa [#allocation4], 1

</llo_original>
